<compile_context>
chip_gen: v7x
topology: tpu7x:2x2x1
jax: 0.10.0
libtpu: 0.0.40
codegen_flags: <defaults>
</compile_context>

<pallas_src>
import math

import jax
import jax.numpy as jnp
from jax.experimental import pallas as pl
from jax.experimental.pallas import tpu as pltpu


# Tile-size targets (auto-reduced to legal divisors for small/demo shapes).
_TS = 512            # rows per fused LN+QKV projection block
_TM, _TN, _TK = 512, 1024, 1024   # generic GEMM tiles (FF output projection)
_FF_TM, _FF_TN = 512, 1024        # fused LN+GEGLU projection tiles
_TQ, _TKV = 1024, 512             # flash-attention q / kv tiles


def _pick_tile(dim, target, align):
    """Largest multiple of `align` that divides `dim` and is <= target.
    Falls back to the full dim (always a legal block shape)."""
    if dim <= target:
        return dim
    t = (target // align) * align
    while t >= align:
        if dim % t == 0:
            return t
        t -= align
    return dim


# ---------------- Fused LayerNorm + per-head projection (Q/K/V) --------------
def _make_ln_headproj_kernel(n_out, n_heads, do_ln, eps=1e-5):
    """Kernel: (optional LN of x tile) -> per-head matmuls, outputs written
    directly in (1, H, ts, Dh) head layout (no XLA transpose afterwards)."""
    def kernel(*refs):
        if do_ln:
            x_ref, g_ref, b_ref = refs[0], refs[1], refs[2]
            w_refs = refs[3:3 + n_out]
            o_refs = refs[3 + n_out:3 + 2 * n_out]
        else:
            x_ref = refs[0]
            w_refs = refs[1:1 + n_out]
            o_refs = refs[1 + n_out:1 + 2 * n_out]

        xt = x_ref[0].astype(jnp.float32)                    # (ts, D)
        if do_ln:
            mean = jnp.mean(xt, axis=-1, keepdims=True)
            var = jnp.mean(jnp.square(xt - mean), axis=-1, keepdims=True)
            xt = (xt - mean) * jax.lax.rsqrt(var + eps)
            xt = xt * g_ref[...] + b_ref[...]
        xn = xt.astype(jnp.bfloat16)

        for i in range(n_out):
            for h in range(n_heads):                          # static unroll
                o_refs[i][0, h] = jnp.dot(
                    xn, w_refs[i][h],
                    preferred_element_type=jnp.float32).astype(o_refs[i].dtype)
    return kernel


def head_projection(x, weights, gamma=None, beta=None):
    """x: (B, S, D) f32.  weights: list of (H, D, Dh) bf16.
    Returns per-weight outputs of shape (B, H, S, Dh) bf16.
    If gamma/beta given, LayerNorm(x) is fused into the prologue."""
    B, S, D = x.shape
    H, Dw, Dh = weights[0].shape
    assert Dw == D
    n = len(weights)
    do_ln = gamma is not None
    ts = _pick_tile(S, _TS, 8)
    grid = (B, S // ts)

    in_specs = [pl.BlockSpec((1, ts, D), lambda b, s: (b, s, 0))]
    inputs = [x]
    if do_ln:
        in_specs += [pl.BlockSpec((1, D), lambda b, s: (0, 0)),
                     pl.BlockSpec((1, D), lambda b, s: (0, 0))]
        inputs += [gamma.reshape(1, D), beta.reshape(1, D)]
    in_specs += [pl.BlockSpec((H, D, Dh), lambda b, s: (0, 0, 0))] * n
    inputs += list(weights)

    out_specs = tuple(pl.BlockSpec((1, H, ts, Dh), lambda b, s: (b, 0, s, 0))
                      for _ in range(n))
    out_shape = tuple(jax.ShapeDtypeStruct((B, H, S, Dh), jnp.bfloat16)
                      for _ in range(n))

    return pl.pallas_call(
        _make_ln_headproj_kernel(n, H, do_ln),
        out_shape=out_shape if n > 1 else out_shape[0],
        grid=grid,
        in_specs=in_specs,
        out_specs=out_specs if n > 1 else out_specs[0],
        compiler_params=pltpu.CompilerParams(
            dimension_semantics=("parallel", "parallel")),
    )(*inputs)


# ------------------------ Flash attention (online softmax) -------------------
def _flash_attn_kernel(q_ref, k_ref, v_ref, o_ref, m_sc, l_sc, acc_sc):
    ki = pl.program_id(3)

    @pl.when(ki == 0)
    def _():
        m_sc[...] = jnp.full_like(m_sc, -jnp.inf)
        l_sc[...] = jnp.zeros_like(l_sc)
        acc_sc[...] = jnp.zeros_like(acc_sc)

    q = q_ref[0, 0]                                          # (tq, Dh) bf16 (scale in Wq)
    k = k_ref[0, 0]                                          # (tkv, Dh)
    v = v_ref[0, 0]

    # contract on Dh of both operands — no explicit k.T transpose
    s = jax.lax.dot_general(q, k, (((1,), (1,)), ((), ())),
                            preferred_element_type=jnp.float32)   # (tq, tkv)

    m_prev = m_sc[...]
    m_new = jnp.maximum(m_prev, jnp.max(s, axis=-1, keepdims=True))
    alpha = jnp.exp(m_prev - m_new)
    p = jnp.exp(s - m_new)
    l_sc[...] = alpha * l_sc[...] + jnp.sum(p, axis=-1, keepdims=True)
    acc_sc[...] = alpha * acc_sc[...] + jnp.dot(
        p.astype(v.dtype), v, preferred_element_type=jnp.float32)
    m_sc[...] = m_new

    @pl.when(ki == pl.num_programs(3) - 1)
    def _():
        o_ref[0, 0] = (acc_sc[...] *
                       pl.reciprocal(l_sc[...], approx=True)).astype(o_ref.dtype)


def flash_attention(q, k, v):
    """q,k,v: (B, H, S, Dh) bf16.  Returns (B, H, Sq, Dh) bf16."""
    B, H, Sq, Dh = q.shape
    _, _, Sk, _ = k.shape
    tq = _pick_tile(Sq, _TQ, 8)
    tkv = _pick_tile(Sk, _TKV, 8)
    grid = (B, H, Sq // tq, Sk // tkv)
    # TODO(synk): for Dh=64, pack 2 heads per grid step to get lane-dense
    # (tq,128) acc/store tiles instead of half-empty vregs / masked stores.
    return pl.pallas_call(
        _flash_attn_kernel,
        out_shape=jax.ShapeDtypeStruct((B, H, Sq, Dh), jnp.bfloat16),
        grid=grid,
        in_specs=[
            pl.BlockSpec((1, 1, tq, Dh), lambda b, h, qi, ki: (b, h, qi, 0)),
            pl.BlockSpec((1, 1, tkv, Dh), lambda b, h, qi, ki: (b, h, ki, 0)),
            pl.BlockSpec((1, 1, tkv, Dh), lambda b, h, qi, ki: (b, h, ki, 0)),
        ],
        out_specs=pl.BlockSpec((1, 1, tq, Dh), lambda b, h, qi, ki: (b, h, qi, 0)),
        scratch_shapes=[pltpu.VMEM((tq, 1), jnp.float32),
                        pltpu.VMEM((tq, 1), jnp.float32),
                        pltpu.VMEM((tq, Dh), jnp.float32)],
        compiler_params=pltpu.CompilerParams(
            dimension_semantics=("parallel", "parallel", "parallel", "arbitrary")),
    )(q, k, v)


# ------------- Attention output projection (head merge fused in) -------------
def attn_out_proj(h, wo_h, bias, residual):
    """h: (B, H, S, Dh) bf16; wo_h: (H, Dh, D) bf16; bias: (D,) f32;
    residual: (B, S, D) f32.  out = merge_heads(h) @ wo + bias + residual."""
    B, H, S, Dh = h.shape
    _, _, D = residual.shape
    tm = _pick_tile(S, _TM, 8)
    tn = _pick_tile(D, _TN, 128)
    grid = (B, S // tm, D // tn)

    def kernel(h_ref, w_ref, b_ref, r_ref, o_ref):
        acc = jnp.dot(h_ref[0, 0], w_ref[0], preferred_element_type=jnp.float32)
        for hh in range(1, H):                               # head-merge reduction
            acc = acc + jnp.dot(h_ref[0, hh], w_ref[hh],
                                preferred_element_type=jnp.float32)
        o_ref[0] = (acc + b_ref[...]
                    + r_ref[0].astype(jnp.float32)).astype(o_ref.dtype)

    return pl.pallas_call(
        kernel,
        out_shape=jax.ShapeDtypeStruct((B, S, D), residual.dtype),
        grid=grid,
        in_specs=[
            pl.BlockSpec((1, H, tm, Dh), lambda b, s, j: (b, 0, s, 0)),
            pl.BlockSpec((H, Dh, tn), lambda b, s, j: (0, 0, j)),
            pl.BlockSpec((1, tn), lambda b, s, j: (0, j)),
            pl.BlockSpec((1, tm, tn), lambda b, s, j: (b, s, j)),
        ],
        out_specs=pl.BlockSpec((1, tm, tn), lambda b, s, j: (b, s, j)),
        compiler_params=pltpu.CompilerParams(
            dimension_semantics=("parallel", "parallel", "parallel")),
    )(h, wo_h, bias.reshape(1, D), residual)


# ---------------- Fused LayerNorm + GEGLU projection (FF first half) ---------
def _ln_ff_geglu_kernel(x_ref, g_ref, b_ref, wx_ref, wg_ref, bx_ref, bg_ref,
                        o_ref, xn_ref):
    # LN computed once per row block (j==0) and cached in VMEM scratch.
    @pl.when(pl.program_id(1) == 0)
    def _():
        xt = x_ref[...].astype(jnp.float32)
        mean = jnp.mean(xt, axis=-1, keepdims=True)
        var = jnp.mean(jnp.square(xt - mean), axis=-1, keepdims=True)
        xn = (xt - mean) * jax.lax.rsqrt(var + 1e-5)
        xn_ref[...] = (xn * g_ref[...] + b_ref[...]).astype(xn_ref.dtype)

    xn = xn_ref[...]
    a = jnp.dot(xn, wx_ref[...], preferred_element_type=jnp.float32) + bx_ref[...]
    g = jnp.dot(xn, wg_ref[...], preferred_element_type=jnp.float32) + bg_ref[...]
    # exact (erf) gelu to match torch.nn.functional.gelu
    o_ref[...] = (a * jax.nn.gelu(g, approximate=False)).astype(o_ref.dtype)


def ln_ff_geglu(x2d, gamma, beta, w_x, b_x, w_g, b_g):
    M, D = x2d.shape
    _, F = w_x.shape
    tm = _pick_tile(M, _FF_TM, 8)
    tn = _pick_tile(F, _FF_TN, 128)
    grid = (M // tm, F // tn)
    return pl.pallas_call(
        _ln_ff_geglu_kernel,
        out_shape=jax.ShapeDtypeStruct((M, F), jnp.bfloat16),
        grid=grid,
        in_specs=[
            pl.BlockSpec((tm, D), lambda i, j: (i, 0)),
            pl.BlockSpec((1, D), lambda i, j: (0, 0)),
            pl.BlockSpec((1, D), lambda i, j: (0, 0)),
            pl.BlockSpec((D, tn), lambda i, j: (0, j)),
            pl.BlockSpec((D, tn), lambda i, j: (0, j)),
            pl.BlockSpec((1, tn), lambda i, j: (0, j)),
            pl.BlockSpec((1, tn), lambda i, j: (0, j)),
        ],
        out_specs=pl.BlockSpec((tm, tn), lambda i, j: (i, j)),
        scratch_shapes=[pltpu.VMEM((tm, D), jnp.bfloat16)],
        compiler_params=pltpu.CompilerParams(
            dimension_semantics=("parallel", "arbitrary")),
    )(x2d, gamma.reshape(1, D), beta.reshape(1, D), w_x, w_g,
      b_x.reshape(1, F), b_g.reshape(1, F))


# -------------- Tiled matmul + bias + residual (FF output GEMM) --------------
def _matmul_bias_res_kernel(x_ref, w_ref, b_ref, r_ref, o_ref, acc_ref):
    @pl.when(pl.program_id(2) == 0)
    def _():
        acc_ref[...] = jnp.zeros_like(acc_ref)

    acc_ref[...] += jnp.dot(x_ref[...], w_ref[...],
                            preferred_element_type=jnp.float32)

    @pl.when(pl.program_id(2) == pl.num_programs(2) - 1)
    def _():
        o_ref[...] = (acc_ref[...] + b_ref[...]
                      + r_ref[...].astype(jnp.float32)).astype(o_ref.dtype)


def linear_bias_residual(x2d, w, b, residual):
    M, K = x2d.shape
    _, N = w.shape
    tm = _pick_tile(M, _TM, 8)
    tn = _pick_tile(N, _TN, 128)
    tk = _pick_tile(K, _TK, 128)
    grid = (M // tm, N // tn, K // tk)
    return pl.pallas_call(
        _matmul_bias_res_kernel,
        out_shape=jax.ShapeDtypeStruct((M, N), residual.dtype),
        grid=grid,
        in_specs=[
            pl.BlockSpec((tm, tk), lambda i, j, kk: (i, kk)),
            pl.BlockSpec((tk, tn), lambda i, j, kk: (kk, j)),
            pl.BlockSpec((1, tn), lambda i, j, kk: (0, j)),
            pl.BlockSpec((tm, tn), lambda i, j, kk: (i, j)),
        ],
        out_specs=pl.BlockSpec((tm, tn), lambda i, j, kk: (i, j)),
        scratch_shapes=[pltpu.VMEM((tm, tn), jnp.float32)],
        compiler_params=pltpu.CompilerParams(
            dimension_semantics=("parallel", "parallel", "arbitrary")),
    )(x2d, w, b.reshape(1, N), residual)


# ------------------------------ Module assembly ------------------------------
def attention_block(x, context, gamma, beta, wq_h, wk_h, wv_h, wo_h, bo):
    """x: (B, S, D) f32 residual stream (LN fused into the Q/K/V projection).
    context: None (self-attn) or (B, Sc, Dc) f32 (cross-attn, no LN on ctx)."""
    if context is None:
        q, k, v = head_projection(x, [wq_h, wk_h, wv_h], gamma, beta)
    else:
        q = head_projection(x, [wq_h], gamma, beta)
        k, v = head_projection(context, [wk_h, wv_h])        # fused K/V
    o = flash_attention(q, k, v)                             # (B, H, S, Dh)
    return attn_out_proj(o, wo_h, bo, x)                     # + bias + residual


def feed_forward(x, gamma, beta, w_x, b_x, w_g, b_g, w_out, b_out):
    B, S, D = x.shape
    x2d = x.reshape(B * S, D)
    h = ln_ff_geglu(x2d, gamma, beta, w_x, b_x, w_g, b_g)    # (B*S, F) bf16
    out = linear_bias_residual(h, w_out, b_out, x2d)         # + bias + residual
    return out.reshape(B, S, D)


def basic_transformer_block(x, context, p, n_heads, d_head):
    # x = attn1(norm1(x)) + x   (self-attention)
    x = attention_block(x, None, p["norm1_g"], p["norm1_b"],
                        p["attn1_wq"], p["attn1_wk"], p["attn1_wv"],
                        p["attn1_wo"], p["attn1_bo"])
    # x = attn2(norm2(x), context) + x   (cross-attention)
    x = attention_block(x, context, p["norm2_g"], p["norm2_b"],
                        p["attn2_wq"], p["attn2_wk"], p["attn2_wv"],
                        p["attn2_wo"], p["attn2_bo"])
    # x = ff(norm3(x)) + x
    x = feed_forward(x, p["norm3_g"], p["norm3_b"],
                     p["ff_wx"], p["ff_bx"], p["ff_wg"], p["ff_bg"],
                     p["ff_wout"], p["ff_bout"])
    return x


# ---------------------------- deterministic params ---------------------------
def init_params(key, dim, n_heads, d_head, context_dim):
    inner = n_heads * d_head
    inner_ff = dim * 4
    scale = d_head ** (-0.5)
    ks = jax.random.split(key, 16)
    bf = jnp.bfloat16

    def w(k, fan_in, fan_out):
        return (jax.random.normal(k, (fan_in, fan_out), jnp.float32)
                * (1.0 / math.sqrt(fan_in)))

    def head_in(wm):   # (D_in, H*Dh) -> (H, D_in, Dh)
        d_in = wm.shape[0]
        return wm.reshape(d_in, n_heads, d_head).transpose(1, 0, 2)

    def head_out(wm):  # (H*Dh, D) -> (H, Dh, D)
        return wm.reshape(n_heads, d_head, dim)

    wproj = w(ks[8], dim, inner_ff * 2)   # [:, :F] -> x-half, [:, F:] -> gate

    return {
        "norm1_g": jnp.ones((dim,), jnp.float32), "norm1_b": jnp.zeros((dim,), jnp.float32),
        "norm2_g": jnp.ones((dim,), jnp.float32), "norm2_b": jnp.zeros((dim,), jnp.float32),
        "norm3_g": jnp.ones((dim,), jnp.float32), "norm3_b": jnp.zeros((dim,), jnp.float32),
        # attn1 (self-attention); softmax scale folded into Wq (bias-free => exact)
        "attn1_wq": head_in(w(ks[0], dim, inner) * scale).astype(bf),
        "attn1_wk": head_in(w(ks[1], dim, inner)).astype(bf),
        "attn1_wv": head_in(w(ks[2], dim, inner)).astype(bf),
        "attn1_wo": head_out(w(ks[3], inner, dim)).astype(bf),
        "attn1_bo": jnp.zeros((dim,), jnp.float32),
        # attn2 (cross-attention)
        "attn2_wq": head_in(w(ks[4], dim, inner) * scale).astype(bf),
        "attn2_wk": head_in(w(ks[5], context_dim, inner)).astype(bf),
        "attn2_wv": head_in(w(ks[6], context_dim, inner)).astype(bf),
        "attn2_wo": head_out(w(ks[7], inner, dim)).astype(bf),
        "attn2_bo": jnp.zeros((dim,), jnp.float32),
        # feed-forward (GEGLU) — projection split into x / gate halves
        "ff_wx": wproj[:, :inner_ff].astype(bf),
        "ff_wg": wproj[:, inner_ff:].astype(bf),
        "ff_bx": jnp.zeros((inner_ff,), jnp.float32),
        "ff_bg": jnp.zeros((inner_ff,), jnp.float32),
        "ff_wout": w(ks[9], inner_ff, dim).astype(bf),
        "ff_bout": jnp.zeros((dim,), jnp.float32),
    }


if __name__ == "__main__":
    B, S, dim = 2, 8, 32
    n_heads, d_head = 4, 8
    context_dim, S_ctx = 16, 8

    key = jax.random.PRNGKey(0)
    kx, kc, kp = jax.random.split(key, 3)
    x = jax.random.normal(kx, (B, S, dim), jnp.float32)
    context = jax.random.normal(kc, (B, S_ctx, context_dim), jnp.float32)
    params = init_params(kp, dim, n_heads, d_head, context_dim)

    out = basic_transformer_block(x, context, params, n_heads, d_head)
    out = jax.block_until_ready(out)
    assert out.shape == (B, S, dim)
    assert out.dtype == jnp.float32
    assert jnp.all(jnp.isfinite(out))
    print("KERNEL_OK")
</pallas_src>

<mosaic_0001>
module attributes {stable_mosaic.version = 11 : i64} {
  func.func @kernel(%arg0: i32, %arg1: i32, %arg2: memref<1x8x32xf32, #tpu.memory_space<vmem>>, %arg3: memref<1x32xf32, #tpu.memory_space<vmem>>, %arg4: memref<1x32xf32, #tpu.memory_space<vmem>>, %arg5: memref<4x32x8xbf16, #tpu.memory_space<vmem>>, %arg6: memref<4x32x8xbf16, #tpu.memory_space<vmem>>, %arg7: memref<4x32x8xbf16, #tpu.memory_space<vmem>>, %arg8: memref<1x4x8x8xbf16, #tpu.memory_space<vmem>>, %arg9: memref<1x4x8x8xbf16, #tpu.memory_space<vmem>>, %arg10: memref<1x4x8x8xbf16, #tpu.memory_space<vmem>>) attributes {dimension_semantics = [#tpu.dimension_semantics<parallel>, #tpu.dimension_semantics<parallel>], iteration_bounds = array<i64: 2, 1>, scalar_prefetch = 0 : i64, scratch_operands = 0 : i64, tpu.core_type = #tpu.core_type<tc>, window_params = [{transform_indices = @transform_0, window_bounds = array<i64: 1, 8, 32>}, {pipeline_mode = #tpu.pipeline_mode<synchronous>, transform_indices = @transform_1, window_bounds = array<i64: 1, 32>}, {pipeline_mode = #tpu.pipeline_mode<synchronous>, transform_indices = @transform_2, window_bounds = array<i64: 1, 32>}, {pipeline_mode = #tpu.pipeline_mode<synchronous>, transform_indices = @transform_3, window_bounds = array<i64: 4, 32, 8>}, {pipeline_mode = #tpu.pipeline_mode<synchronous>, transform_indices = @transform_4, window_bounds = array<i64: 4, 32, 8>}, {pipeline_mode = #tpu.pipeline_mode<synchronous>, transform_indices = @transform_5, window_bounds = array<i64: 4, 32, 8>}, {transform_indices = @transform_6, window_bounds = array<i64: 1, 4, 8, 8>}, {transform_indices = @transform_7, window_bounds = array<i64: 1, 4, 8, 8>}, {transform_indices = @transform_8, window_bounds = array<i64: 1, 4, 8, 8>}]} {
    %c0 = arith.constant 0 : index
    %c0_0 = arith.constant 0 : index
    %c0_1 = arith.constant 0 : index
    %0 = vector.load %arg2[%c0, %c0_0, %c0_1] : memref<1x8x32xf32, #tpu.memory_space<vmem>>, vector<1x8x32xf32>
    %1 = vector.shape_cast %0 : vector<1x8x32xf32> to vector<8x32xf32>
    %cst = arith.constant dense<0.000000e+00> : vector<8xf32>
    %2 = vector.multi_reduction <add>, %1, %cst [1] : vector<8x32xf32> to vector<8xf32>
    %3 = vector.shape_cast %2 : vector<8xf32> to vector<8x1xf32>
    %cst_2 = arith.constant 3.200000e+01 : f32
    %4 = vector.broadcast %cst_2 : f32 to vector<8x1xf32>
    %5 = arith.divf %3, %4 : vector<8x1xf32>
    %6 = vector.broadcast %5 : vector<8x1xf32> to vector<8x32xf32>
    %7 = arith.subf %1, %6 : vector<8x32xf32>
    %8 = arith.mulf %7, %7 : vector<8x32xf32>
    %cst_3 = arith.constant dense<0.000000e+00> : vector<8xf32>
    %9 = vector.multi_reduction <add>, %8, %cst_3 [1] : vector<8x32xf32> to vector<8xf32>
    %10 = vector.shape_cast %9 : vector<8xf32> to vector<8x1xf32>
    %cst_4 = arith.constant 3.200000e+01 : f32
    %11 = vector.broadcast %cst_4 : f32 to vector<8x1xf32>
    %12 = arith.divf %10, %11 : vector<8x1xf32>
    %13 = vector.broadcast %5 : vector<8x1xf32> to vector<8x32xf32>
    %14 = arith.subf %1, %13 : vector<8x32xf32>
    %cst_5 = arith.constant 9.99999974E-6 : f32
    %15 = vector.broadcast %cst_5 : f32 to vector<8x1xf32>
    %16 = arith.addf %12, %15 : vector<8x1xf32>
    %17 = math.rsqrt %16 : vector<8x1xf32>
    %18 = vector.broadcast %17 : vector<8x1xf32> to vector<8x32xf32>
    %19 = arith.mulf %14, %18 : vector<8x32xf32>
    %c0_6 = arith.constant 0 : index
    %c0_7 = arith.constant 0 : index
    %20 = vector.load %arg3[%c0_6, %c0_7] : memref<1x32xf32, #tpu.memory_space<vmem>>, vector<1x32xf32>
    %21 = vector.broadcast %20 : vector<1x32xf32> to vector<8x32xf32>
    %22 = arith.mulf %19, %21 : vector<8x32xf32>
    %c0_8 = arith.constant 0 : index
    %c0_9 = arith.constant 0 : index
    %23 = vector.load %arg4[%c0_8, %c0_9] : memref<1x32xf32, #tpu.memory_space<vmem>>, vector<1x32xf32>
    %24 = vector.broadcast %23 : vector<1x32xf32> to vector<8x32xf32>
    %25 = arith.addf %22, %24 : vector<8x32xf32>
    %26 = arith.truncf %25 : vector<8x32xf32> to vector<8x32xbf16>
    %c0_10 = arith.constant 0 : index
    %c0_11 = arith.constant 0 : index
    %c0_12 = arith.constant 0 : index
    %27 = vector.load %arg5[%c0_10, %c0_11, %c0_12] : memref<4x32x8xbf16, #tpu.memory_space<vmem>>, vector<1x32x8xbf16>
    %28 = vector.shape_cast %27 : vector<1x32x8xbf16> to vector<32x8xbf16>
    %cst_13 = arith.constant dense<0.000000e+00> : vector<8x8xf32>
    %29 = tpu.matmul %26, %28, %cst_13 {dimension_numbers = #tpu.dot_dimension_numbers<[1], [0], [0], [1], [0, 0, 1, 1], [], []>} : vector<8x32xbf16>, vector<32x8xbf16>, vector<8x8xf32> -> vector<8x8xf32>
    %30 = arith.truncf %29 : vector<8x8xf32> to vector<8x8xbf16>
    %c0_14 = arith.constant 0 : index
    %c0_15 = arith.constant 0 : index
    %c0_16 = arith.constant 0 : index
    %c0_17 = arith.constant 0 : index
    %31 = vector.load %arg8[%c0_14, %c0_15, %c0_16, %c0_17] : memref<1x4x8x8xbf16, #tpu.memory_space<vmem>>, vector<1x1x8x8xbf16>
    %32 = vector.shape_cast %31 : vector<1x1x8x8xbf16> to vector<8x8xbf16>
    %33 = vector.shape_cast %30 : vector<8x8xbf16> to vector<1x1x8x8xbf16>
    tpu.vector_store %arg8[%c0_14, %c0_15, %c0_16, %c0_17], %33 {strides = array<i32>} : memref<1x4x8x8xbf16, #tpu.memory_space<vmem>>, vector<1x1x8x8xbf16>,
    %c1 = arith.constant 1 : index
    %c0_18 = arith.constant 0 : index
    %c0_19 = arith.constant 0 : index
    %34 = vector.load %arg5[%c1, %c0_18, %c0_19] : memref<4x32x8xbf16, #tpu.memory_space<vmem>>, vector<1x32x8xbf16>
    %35 = vector.shape_cast %34 : vector<1x32x8xbf16> to vector<32x8xbf16>
    %cst_20 = arith.constant dense<0.000000e+00> : vector<8x8xf32>
    %36 = tpu.matmul %26, %35, %cst_20 {dimension_numbers = #tpu.dot_dimension_numbers<[1], [0], [0], [1], [0, 0, 1, 1], [], []>} : vector<8x32xbf16>, vector<32x8xbf16>, vector<8x8xf32> -> vector<8x8xf32>
    %37 = arith.truncf %36 : vector<8x8xf32> to vector<8x8xbf16>
    %c0_21 = arith.constant 0 : index
    %c1_22 = arith.constant 1 : index
    %c0_23 = arith.constant 0 : index
    %c0_24 = arith.constant 0 : index
    %38 = vector.load %arg8[%c0_21, %c1_22, %c0_23, %c0_24] : memref<1x4x8x8xbf16, #tpu.memory_space<vmem>>, vector<1x1x8x8xbf16>
    %39 = vector.shape_cast %38 : vector<1x1x8x8xbf16> to vector<8x8xbf16>
    %40 = vector.shape_cast %37 : vector<8x8xbf16> to vector<1x1x8x8xbf16>
    tpu.vector_store %arg8[%c0_21, %c1_22, %c0_23, %c0_24], %40 {strides = array<i32>} : memref<1x4x8x8xbf16, #tpu.memory_space<vmem>>, vector<1x1x8x8xbf16>,
    %c2 = arith.constant 2 : index
    %c0_25 = arith.constant 0 : index
    %c0_26 = arith.constant 0 : index
    %41 = vector.load %arg5[%c2, %c0_25, %c0_26] : memref<4x32x8xbf16, #tpu.memory_space<vmem>>, vector<1x32x8xbf16>
    %42 = vector.shape_cast %41 : vector<1x32x8xbf16> to vector<32x8xbf16>
    %cst_27 = arith.constant dense<0.000000e+00> : vector<8x8xf32>
    %43 = tpu.matmul %26, %42, %cst_27 {dimension_numbers = #tpu.dot_dimension_numbers<[1], [0], [0], [1], [0, 0, 1, 1], [], []>} : vector<8x32xbf16>, vector<32x8xbf16>, vector<8x8xf32> -> vector<8x8xf32>
    %44 = arith.truncf %43 : vector<8x8xf32> to vector<8x8xbf16>
    %c0_28 = arith.constant 0 : index
    %c2_29 = arith.constant 2 : index
    %c0_30 = arith.constant 0 : index
    %c0_31 = arith.constant 0 : index
    %45 = vector.load %arg8[%c0_28, %c2_29, %c0_30, %c0_31] : memref<1x4x8x8xbf16, #tpu.memory_space<vmem>>, vector<1x1x8x8xbf16>
    %46 = vector.shape_cast %45 : vector<1x1x8x8xbf16> to vector<8x8xbf16>
    %47 = vector.shape_cast %44 : vector<8x8xbf16> to vector<1x1x8x8xbf16>
    tpu.vector_store %arg8[%c0_28, %c2_29, %c0_30, %c0_31], %47 {strides = array<i32>} : memref<1x4x8x8xbf16, #tpu.memory_space<vmem>>, vector<1x1x8x8xbf16>,
    %c3 = arith.constant 3 : index
    %c0_32 = arith.constant 0 : index
    %c0_33 = arith.constant 0 : index
    %48 = vector.load %arg5[%c3, %c0_32, %c0_33] : memref<4x32x8xbf16, #tpu.memory_space<vmem>>, vector<1x32x8xbf16>
    %49 = vector.shape_cast %48 : vector<1x32x8xbf16> to vector<32x8xbf16>
    %cst_34 = arith.constant dense<0.000000e+00> : vector<8x8xf32>
    %50 = tpu.matmul %26, %49, %cst_34 {dimension_numbers = #tpu.dot_dimension_numbers<[1], [0], [0], [1], [0, 0, 1, 1], [], []>} : vector<8x32xbf16>, vector<32x8xbf16>, vector<8x8xf32> -> vector<8x8xf32>
    %51 = arith.truncf %50 : vector<8x8xf32> to vector<8x8xbf16>
    %c0_35 = arith.constant 0 : index
    %c3_36 = arith.constant 3 : index
    %c0_37 = arith.constant 0 : index
    %c0_38 = arith.constant 0 : index
    %52 = vector.load %arg8[%c0_35, %c3_36, %c0_37, %c0_38] : memref<1x4x8x8xbf16, #tpu.memory_space<vmem>>, vector<1x1x8x8xbf16>
    %53 = vector.shape_cast %52 : vector<1x1x8x8xbf16> to vector<8x8xbf16>
    %54 = vector.shape_cast %51 : vector<8x8xbf16> to vector<1x1x8x8xbf16>
    tpu.vector_store %arg8[%c0_35, %c3_36, %c0_37, %c0_38], %54 {strides = array<i32>} : memref<1x4x8x8xbf16, #tpu.memory_space<vmem>>, vector<1x1x8x8xbf16>,
    %c0_39 = arith.constant 0 : index
    %c0_40 = arith.constant 0 : index
    %c0_41 = arith.constant 0 : index
    %55 = vector.load %arg6[%c0_39, %c0_40, %c0_41] : memref<4x32x8xbf16, #tpu.memory_space<vmem>>, vector<1x32x8xbf16>
    %56 = vector.shape_cast %55 : vector<1x32x8xbf16> to vector<32x8xbf16>
    %cst_42 = arith.constant dense<0.000000e+00> : vector<8x8xf32>
    %57 = tpu.matmul %26, %56, %cst_42 {dimension_numbers = #tpu.dot_dimension_numbers<[1], [0], [0], [1], [0, 0, 1, 1], [], []>} : vector<8x32xbf16>, vector<32x8xbf16>, vector<8x8xf32> -> vector<8x8xf32>
    %58 = arith.truncf %57 : vector<8x8xf32> to vector<8x8xbf16>
    %c0_43 = arith.constant 0 : index
    %c0_44 = arith.constant 0 : index
    %c0_45 = arith.constant 0 : index
    %c0_46 = arith.constant 0 : index
    %59 = vector.load %arg9[%c0_43, %c0_44, %c0_45, %c0_46] : memref<1x4x8x8xbf16, #tpu.memory_space<vmem>>, vector<1x1x8x8xbf16>
    %60 = vector.shape_cast %59 : vector<1x1x8x8xbf16> to vector<8x8xbf16>
    %61 = vector.shape_cast %58 : vector<8x8xbf16> to vector<1x1x8x8xbf16>
    tpu.vector_store %arg9[%c0_43, %c0_44, %c0_45, %c0_46], %61 {strides = array<i32>} : memref<1x4x8x8xbf16, #tpu.memory_space<vmem>>, vector<1x1x8x8xbf16>,
    %c1_47 = arith.constant 1 : index
    %c0_48 = arith.constant 0 : index
    %c0_49 = arith.constant 0 : index
    %62 = vector.load %arg6[%c1_47, %c0_48, %c0_49] : memref<4x32x8xbf16, #tpu.memory_space<vmem>>, vector<1x32x8xbf16>
    %63 = vector.shape_cast %62 : vector<1x32x8xbf16> to vector<32x8xbf16>
    %cst_50 = arith.constant dense<0.000000e+00> : vector<8x8xf32>
    %64 = tpu.matmul %26, %63, %cst_50 {dimension_numbers = #tpu.dot_dimension_numbers<[1], [0], [0], [1], [0, 0, 1, 1], [], []>} : vector<8x32xbf16>, vector<32x8xbf16>, vector<8x8xf32> -> vector<8x8xf32>
    %65 = arith.truncf %64 : vector<8x8xf32> to vector<8x8xbf16>
    %c0_51 = arith.constant 0 : index
    %c1_52 = arith.constant 1 : index
    %c0_53 = arith.constant 0 : index
    %c0_54 = arith.constant 0 : index
    %66 = vector.load %arg9[%c0_51, %c1_52, %c0_53, %c0_54] : memref<1x4x8x8xbf16, #tpu.memory_space<vmem>>, vector<1x1x8x8xbf16>
    %67 = vector.shape_cast %66 : vector<1x1x8x8xbf16> to vector<8x8xbf16>
    %68 = vector.shape_cast %65 : vector<8x8xbf16> to vector<1x1x8x8xbf16>
    tpu.vector_store %arg9[%c0_51, %c1_52, %c0_53, %c0_54], %68 {strides = array<i32>} : memref<1x4x8x8xbf16, #tpu.memory_space<vmem>>, vector<1x1x8x8xbf16>,
    %c2_55 = arith.constant 2 : index
    %c0_56 = arith.constant 0 : index
    %c0_57 = arith.constant 0 : index
    %69 = vector.load %arg6[%c2_55, %c0_56, %c0_57] : memref<4x32x8xbf16, #tpu.memory_space<vmem>>, vector<1x32x8xbf16>
    %70 = vector.shape_cast %69 : vector<1x32x8xbf16> to vector<32x8xbf16>
    %cst_58 = arith.constant dense<0.000000e+00> : vector<8x8xf32>
    %71 = tpu.matmul %26, %70, %cst_58 {dimension_numbers = #tpu.dot_dimension_numbers<[1], [0], [0], [1], [0, 0, 1, 1], [], []>} : vector<8x32xbf16>, vector<32x8xbf16>, vector<8x8xf32> -> vector<8x8xf32>
    %72 = arith.truncf %71 : vector<8x8xf32> to vector<8x8xbf16>
    %c0_59 = arith.constant 0 : index
    %c2_60 = arith.constant 2 : index
    %c0_61 = arith.constant 0 : index
    %c0_62 = arith.constant 0 : index
    %73 = vector.load %arg9[%c0_59, %c2_60, %c0_61, %c0_62] : memref<1x4x8x8xbf16, #tpu.memory_space<vmem>>, vector<1x1x8x8xbf16>
    %74 = vector.shape_cast %73 : vector<1x1x8x8xbf16> to vector<8x8xbf16>
    %75 = vector.shape_cast %72 : vector<8x8xbf16> to vector<1x1x8x8xbf16>
    tpu.vector_store %arg9[%c0_59, %c2_60, %c0_61, %c0_62], %75 {strides = array<i32>} : memref<1x4x8x8xbf16, #tpu.memory_space<vmem>>, vector<1x1x8x8xbf16>,
    %c3_63 = arith.constant 3 : index
    %c0_64 = arith.constant 0 : index
    %c0_65 = arith.constant 0 : index
    %76 = vector.load %arg6[%c3_63, %c0_64, %c0_65] : memref<4x32x8xbf16, #tpu.memory_space<vmem>>, vector<1x32x8xbf16>
    %77 = vector.shape_cast %76 : vector<1x32x8xbf16> to vector<32x8xbf16>
    %cst_66 = arith.constant dense<0.000000e+00> : vector<8x8xf32>
    %78 = tpu.matmul %26, %77, %cst_66 {dimension_numbers = #tpu.dot_dimension_numbers<[1], [0], [0], [1], [0, 0, 1, 1], [], []>} : vector<8x32xbf16>, vector<32x8xbf16>, vector<8x8xf32> -> vector<8x8xf32>
    %79 = arith.truncf %78 : vector<8x8xf32> to vector<8x8xbf16>
    %c0_67 = arith.constant 0 : index
    %c3_68 = arith.constant 3 : index
    %c0_69 = arith.constant 0 : index
    %c0_70 = arith.constant 0 : index
    %80 = vector.load %arg9[%c0_67, %c3_68, %c0_69, %c0_70] : memref<1x4x8x8xbf16, #tpu.memory_space<vmem>>, vector<1x1x8x8xbf16>
    %81 = vector.shape_cast %80 : vector<1x1x8x8xbf16> to vector<8x8xbf16>
    %82 = vector.shape_cast %79 : vector<8x8xbf16> to vector<1x1x8x8xbf16>
    tpu.vector_store %arg9[%c0_67, %c3_68, %c0_69, %c0_70], %82 {strides = array<i32>} : memref<1x4x8x8xbf16, #tpu.memory_space<vmem>>, vector<1x1x8x8xbf16>,
    %c0_71 = arith.constant 0 : index
    %c0_72 = arith.constant 0 : index
    %c0_73 = arith.constant 0 : index
    %83 = vector.load %arg7[%c0_71, %c0_72, %c0_73] : memref<4x32x8xbf16, #tpu.memory_space<vmem>>, vector<1x32x8xbf16>
    %84 = vector.shape_cast %83 : vector<1x32x8xbf16> to vector<32x8xbf16>
    %cst_74 = arith.constant dense<0.000000e+00> : vector<8x8xf32>
    %85 = tpu.matmul %26, %84, %cst_74 {dimension_numbers = #tpu.dot_dimension_numbers<[1], [0], [0], [1], [0, 0, 1, 1], [], []>} : vector<8x32xbf16>, vector<32x8xbf16>, vector<8x8xf32> -> vector<8x8xf32>
    %86 = arith.truncf %85 : vector<8x8xf32> to vector<8x8xbf16>
    %c0_75 = arith.constant 0 : index
    %c0_76 = arith.constant 0 : index
    %c0_77 = arith.constant 0 : index
    %c0_78 = arith.constant 0 : index
    %87 = vector.load %arg10[%c0_75, %c0_76, %c0_77, %c0_78] : memref<1x4x8x8xbf16, #tpu.memory_space<vmem>>, vector<1x1x8x8xbf16>
    %88 = vector.shape_cast %87 : vector<1x1x8x8xbf16> to vector<8x8xbf16>
    %89 = vector.shape_cast %86 : vector<8x8xbf16> to vector<1x1x8x8xbf16>
    tpu.vector_store %arg10[%c0_75, %c0_76, %c0_77, %c0_78], %89 {strides = array<i32>} : memref<1x4x8x8xbf16, #tpu.memory_space<vmem>>, vector<1x1x8x8xbf16>,
    %c1_79 = arith.constant 1 : index
    %c0_80 = arith.constant 0 : index
    %c0_81 = arith.constant 0 : index
    %90 = vector.load %arg7[%c1_79, %c0_80, %c0_81] : memref<4x32x8xbf16, #tpu.memory_space<vmem>>, vector<1x32x8xbf16>
    %91 = vector.shape_cast %90 : vector<1x32x8xbf16> to vector<32x8xbf16>
    %cst_82 = arith.constant dense<0.000000e+00> : vector<8x8xf32>
    %92 = tpu.matmul %26, %91, %cst_82 {dimension_numbers = #tpu.dot_dimension_numbers<[1], [0], [0], [1], [0, 0, 1, 1], [], []>} : vector<8x32xbf16>, vector<32x8xbf16>, vector<8x8xf32> -> vector<8x8xf32>
    %93 = arith.truncf %92 : vector<8x8xf32> to vector<8x8xbf16>
    %c0_83 = arith.constant 0 : index
    %c1_84 = arith.constant 1 : index
    %c0_85 = arith.constant 0 : index
    %c0_86 = arith.constant 0 : index
    %94 = vector.load %arg10[%c0_83, %c1_84, %c0_85, %c0_86] : memref<1x4x8x8xbf16, #tpu.memory_space<vmem>>, vector<1x1x8x8xbf16>
    %95 = vector.shape_cast %94 : vector<1x1x8x8xbf16> to vector<8x8xbf16>
    %96 = vector.shape_cast %93 : vector<8x8xbf16> to vector<1x1x8x8xbf16>
    tpu.vector_store %arg10[%c0_83, %c1_84, %c0_85, %c0_86], %96 {strides = array<i32>} : memref<1x4x8x8xbf16, #tpu.memory_space<vmem>>, vector<1x1x8x8xbf16>,
    %c2_87 = arith.constant 2 : index
    %c0_88 = arith.constant 0 : index
    %c0_89 = arith.constant 0 : index
    %97 = vector.load %arg7[%c2_87, %c0_88, %c0_89] : memref<4x32x8xbf16, #tpu.memory_space<vmem>>, vector<1x32x8xbf16>
    %98 = vector.shape_cast %97 : vector<1x32x8xbf16> to vector<32x8xbf16>
    %cst_90 = arith.constant dense<0.000000e+00> : vector<8x8xf32>
    %99 = tpu.matmul %26, %98, %cst_90 {dimension_numbers = #tpu.dot_dimension_numbers<[1], [0], [0], [1], [0, 0, 1, 1], [], []>} : vector<8x32xbf16>, vector<32x8xbf16>, vector<8x8xf32> -> vector<8x8xf32>
    %100 = arith.truncf %99 : vector<8x8xf32> to vector<8x8xbf16>
    %c0_91 = arith.constant 0 : index
    %c2_92 = arith.constant 2 : index
    %c0_93 = arith.constant 0 : index
    %c0_94 = arith.constant 0 : index
    %101 = vector.load %arg10[%c0_91, %c2_92, %c0_93, %c0_94] : memref<1x4x8x8xbf16, #tpu.memory_space<vmem>>, vector<1x1x8x8xbf16>
    %102 = vector.shape_cast %101 : vector<1x1x8x8xbf16> to vector<8x8xbf16>
    %103 = vector.shape_cast %100 : vector<8x8xbf16> to vector<1x1x8x8xbf16>
    tpu.vector_store %arg10[%c0_91, %c2_92, %c0_93, %c0_94], %103 {strides = array<i32>} : memref<1x4x8x8xbf16, #tpu.memory_space<vmem>>, vector<1x1x8x8xbf16>,
    %c3_95 = arith.constant 3 : index
    %c0_96 = arith.constant 0 : index
    %c0_97 = arith.constant 0 : index
    %104 = vector.load %arg7[%c3_95, %c0_96, %c0_97] : memref<4x32x8xbf16, #tpu.memory_space<vmem>>, vector<1x32x8xbf16>
    %105 = vector.shape_cast %104 : vector<1x32x8xbf16> to vector<32x8xbf16>
    %cst_98 = arith.constant dense<0.000000e+00> : vector<8x8xf32>
    %106 = tpu.matmul %26, %105, %cst_98 {dimension_numbers = #tpu.dot_dimension_numbers<[1], [0], [0], [1], [0, 0, 1, 1], [], []>} : vector<8x32xbf16>, vector<32x8xbf16>, vector<8x8xf32> -> vector<8x8xf32>
    %107 = arith.truncf %106 : vector<8x8xf32> to vector<8x8xbf16>
    %c0_99 = arith.constant 0 : index
    %c3_100 = arith.constant 3 : index
    %c0_101 = arith.constant 0 : index
    %c0_102 = arith.constant 0 : index
    %108 = vector.load %arg10[%c0_99, %c3_100, %c0_101, %c0_102] : memref<1x4x8x8xbf16, #tpu.memory_space<vmem>>, vector<1x1x8x8xbf16>
    %109 = vector.shape_cast %108 : vector<1x1x8x8xbf16> to vector<8x8xbf16>
    %110 = vector.shape_cast %107 : vector<8x8xbf16> to vector<1x1x8x8xbf16>
    tpu.vector_store %arg10[%c0_99, %c3_100, %c0_101, %c0_102], %110 {strides = array<i32>} : memref<1x4x8x8xbf16, #tpu.memory_space<vmem>>, vector<1x1x8x8xbf16>,
    return
  }
  func.func @transform_0(%arg0: i32, %arg1: i32) -> (i32, i32, i32) {
    %c0_i32 = arith.constant 0 : i32
    %c0_i32_0 = arith.constant 0 : i32
    return %arg0, %arg1, %c0_i32 : i32, i32, i32
  }
  func.func @transform_1(%arg0: i32, %arg1: i32) -> (i32, i32) {
    %c0_i32 = arith.constant 0 : i32
    %c0_i32_0 = arith.constant 0 : i32
    %c0_i32_1 = arith.constant 0 : i32
    return %c0_i32, %c0_i32_0 : i32, i32
  }
  func.func @transform_2(%arg0: i32, %arg1: i32) -> (i32, i32) {
    %c0_i32 = arith.constant 0 : i32
    %c0_i32_0 = arith.constant 0 : i32
    %c0_i32_1 = arith.constant 0 : i32
    return %c0_i32, %c0_i32_0 : i32, i32
  }
  func.func @transform_3(%arg0: i32, %arg1: i32) -> (i32, i32, i32) {
    %c0_i32 = arith.constant 0 : i32
    %c0_i32_0 = arith.constant 0 : i32
    %c0_i32_1 = arith.constant 0 : i32
    %c0_i32_2 = arith.constant 0 : i32
    return %c0_i32, %c0_i32_0, %c0_i32_1 : i32, i32, i32
  }
  func.func @transform_4(%arg0: i32, %arg1: i32) -> (i32, i32, i32) {
    %c0_i32 = arith.constant 0 : i32
    %c0_i32_0 = arith.constant 0 : i32
    %c0_i32_1 = arith.constant 0 : i32
    %c0_i32_2 = arith.constant 0 : i32
    return %c0_i32, %c0_i32_0, %c0_i32_1 : i32, i32, i32
  }
  func.func @transform_5(%arg0: i32, %arg1: i32) -> (i32, i32, i32) {
    %c0_i32 = arith.constant 0 : i32
    %c0_i32_0 = arith.constant 0 : i32
    %c0_i32_1 = arith.constant 0 : i32
    %c0_i32_2 = arith.constant 0 : i32
    return %c0_i32, %c0_i32_0, %c0_i32_1 : i32, i32, i32
  }
  func.func @transform_6(%arg0: i32, %arg1: i32) -> (i32, i32, i32, i32) {
    %c0_i32 = arith.constant 0 : i32
    %c0_i32_0 = arith.constant 0 : i32
    %c0_i32_1 = arith.constant 0 : i32
    return %arg0, %c0_i32, %arg1, %c0_i32_0 : i32, i32, i32, i32
  }
  func.func @transform_7(%arg0: i32, %arg1: i32) -> (i32, i32, i32, i32) {
    %c0_i32 = arith.constant 0 : i32
    %c0_i32_0 = arith.constant 0 : i32
    %c0_i32_1 = arith.constant 0 : i32
    return %arg0, %c0_i32, %arg1, %c0_i32_0 : i32, i32, i32, i32
  }
  func.func @transform_8(%arg0: i32, %arg1: i32) -> (i32, i32, i32, i32) {
    %c0_i32 = arith.constant 0 : i32
    %c0_i32_0 = arith.constant 0 : i32
    %c0_i32_1 = arith.constant 0 : i32
    return %arg0, %c0_i32, %arg1, %c0_i32_0 : i32, i32, i32, i32
  }
}

</mosaic_0001>

<llo_original>
// kernel: tpu_custom_call.1
$region0: #{tpu_custom_call.1}
  #allocation0 [shape = 'u32[]', space=smem, size = 0x4, offset = 0x4, fixed_abs, tag = 'smem constant byte address 0x4 - core index']
  #allocation1 [shape = 'u32[144,128]{1,0:T(1,128)}', space=vmem, size = 0x12000, scoped, tag = 'internal scratch']
  %s0 = inlined_call_operand.vmem [shape: f32[2,8,32], index: 0, kind: input, shape index: {}]
  %s1 = inlined_call_operand.vmem [shape: f32[1,32], index: 1, kind: input, shape index: {}]
  %s2 = inlined_call_operand.vmem [shape: f32[1,32], index: 2, kind: input, shape index: {}]
  %s3 = inlined_call_operand.vmem [shape: bf16[4,32,8], index: 3, kind: input, shape index: {}]
  %s4 = inlined_call_operand.vmem [shape: bf16[4,32,8], index: 4, kind: input, shape index: {}]
  %s5 = inlined_call_operand.vmem [shape: bf16[4,32,8], index: 5, kind: input, shape index: {}]
  %s6 = inlined_call_operand.hbm [shape: bf16[2,4,8,8], index: 6, kind: output, shape index: {0}]
  %s7 = inlined_call_operand.hbm [shape: bf16[2,4,8,8], index: 7, kind: output, shape index: {1}]
  %s8 = inlined_call_operand.hbm [shape: bf16[2,4,8,8], index: 8, kind: output, shape index: {2}]
  %9 = xla_tuple %s6, %s7, %s8
  %s10 = sld [smem:[#allocation0]]
  $region73: #{tpu_custom_call.1} parent=0
    _
  %s12 = ssub.s32 1, %s10
  %s13 = scalar_select 0, %s12, %s10
  $region1: #{tpu_custom_call.1} parent=0
    #allocation2 [shape = 'u8[16384]{0}', space=vmem, size = 0x4000, scoped, tag = 'output window, operand 0']
    #allocation3 [shape = 's32[2]{0}', space=sflag, size = 0x8, scoped, tag = 'scoped memory for tpu_custom_call.1']
    #allocation4 [shape = 'u8[16384]{0}', space=vmem, size = 0x4000, scoped, tag = 'output window, operand 1']
    #allocation5 [shape = 's32[2]{0}', space=sflag, size = 0x8, scoped, tag = 'scoped memory for tpu_custom_call.1']
    #allocation6 [shape = 'u8[16384]{0}', space=vmem, size = 0x4000, scoped, tag = 'output window, operand 2']
    %14 = vsyncpa [#allocation3], 0
    %s15 = scalar_lea.sflag [#allocation3], 1
    %16 = vsyncpa %s15, 0
    %17 = vsyncpa [#allocation5], 0
    %s18 = scalar_lea.sflag [#allocation5], 1
    %19 = vsyncpa %s18, 0
    loop: start=0, step=1, limit=4
    $region2: #{tpu_custom_call.1} parent=1 // loop_pre_header
      _
    $region3: #{tpu_custom_call.1} parent=1 // loop_header
      %s21 = sphi 0, %s25
      %p22 = scmp.ge.s32.totalorder %s21, 4
      %s28 = sphi 0, %s40
      %s29 = sphi 0, %s36
      %s30 = sphi 0, %s28
      %s31 = sphi 0, %s29
      %s32 = sphi 0, %s30
      %s33 = sphi 0, %s31
      %s45 = sphi 0, %s47
      %s48 = sphi 0, %s45
      %s49 = sphi 0, %s48
      %s65 = sphi 0, %s49
      %s69 = sphi 0, %s69
      %s71 = sphi 0, %s69
      %s72 = sphi 0, %s71
      %s86 = sphi 0, %s72
      %s90 = sphi 0, %s90
      %s92 = sphi 0, %s90
      %s93 = sphi 0, %s92
      %s107 = sphi 0, %s93
      %s111 = sphi 0, %s111
      %s113 = sphi 0, %s111
      %s114 = sphi 0, %s113
      %s128 = sphi 0, %s114
      %s132 = sphi 0, %s132
      %s134 = sphi 0, %s132
      %s135 = sphi 0, %s134
      %s149 = sphi 0, %s135
      %s153 = sphi 0, %s153
      %s155 = sphi 0, %s153
      %s156 = sphi 0, %s155
      %s170 = sphi 0, %s156
      %s178 = sphi 0, %s180
      %s181 = sphi 0, %s178
      %s182 = sphi 0, %s181
      %s198 = sphi 0, %s182
      %s206 = sphi 0, %s208
      %s209 = sphi 0, %s206
      %s210 = sphi 0, %s209
      %s226 = sphi 0, %s210
      %s234 = sphi 0, %s236
      %s237 = sphi 0, %s234
      %s238 = sphi 0, %s237
      %s254 = sphi 0, %s238
    $region4: #{tpu_custom_call.1} parent=1 // loop_header_branch
      %24 = sbr.rel (%p22) target = $region8
    $region5: #{tpu_custom_call.1} parent=1 // loop_body
      %s26 = ssub.s32 %s21, 1
      %s27 = ssub.s32 %s21, 2
      %s34 = sadd.s32 1, %s29
      %p35 = scmp.ge.s32.totalorder %s34, 1
      %s36 = scalar_select %p35, 0, %s34
      %s37 = sadd.s32 1, %s28
      %s38 = scalar_select %p35, %s37, %s28
      %p39 = scmp.ge.s32.totalorder %s38, 2
      %s40 = scalar_select %p39, 0, %s38
      %s41 = ssub.s32 %s28, %s40
      %s42 = ssub.s32 %s29, %s36
      %s43 = sor.u32 %s41, %s42
      %p44 = scmp.eq.s32.totalorder %s43, 0
      %s46 = sadd.s32 %s45, 1
      %s47 = scalar_select %p44, %s45, %s46
      %p50 = pneg %p44
      %p51 = scmp.eq.s32.totalorder %s21, 1
      %p52 = por %p50, %p51
      %p53 = scmp.ne.s32.totalorder %s45, %s48
      %p54 = scmp.eq.s32.totalorder %s21, 0
      %p55 = por %p53, %p54
      %p56 = scmp.ne.s32.totalorder %s45, %s48
      %p57 = scmp.eq.s32.totalorder %s26, 1
      %p58 = por %p56, %p57
      %p59 = scmp.ne.s32.totalorder %s48, %s49
      %p60 = scmp.eq.s32.totalorder %s26, 0
      %p61 = por %p59, %p60
      %p62 = scmp.ne.s32.totalorder %s48, %s49
      %p63 = scmp.eq.s32.totalorder %s27, 1
      %p64 = por %p62, %p63
      %p66 = scmp.ne.s32.totalorder %s49, %s65
      %p67 = scmp.eq.s32.totalorder %s27, 0
      %p68 = por %p66, %p67
      %s70 = sadd.s32 %s69, 1
      %p73 = scmp.eq.s32.totalorder %s21, 1
      %p74 = scmp.ne.s32.totalorder %s69, %s71
      %p75 = scmp.eq.s32.totalorder %s21, 0
      %p76 = por %p74, %p75
      %p77 = scmp.ne.s32.totalorder %s69, %s71
      %p78 = scmp.eq.s32.totalorder %s26, 1
      %p79 = por %p77, %p78
      %p80 = scmp.ne.s32.totalorder %s71, %s72
      %p81 = scmp.eq.s32.totalorder %s26, 0
      %p82 = por %p80, %p81
      %p83 = scmp.ne.s32.totalorder %s71, %s72
      %p84 = scmp.eq.s32.totalorder %s27, 1
      %p85 = por %p83, %p84
      %p87 = scmp.ne.s32.totalorder %s72, %s86
      %p88 = scmp.eq.s32.totalorder %s27, 0
      %p89 = por %p87, %p88
      %s91 = sadd.s32 %s90, 1
      %p94 = scmp.eq.s32.totalorder %s21, 1
      %p95 = scmp.ne.s32.totalorder %s90, %s92
      %p96 = scmp.eq.s32.totalorder %s21, 0
      %p97 = por %p95, %p96
      %p98 = scmp.ne.s32.totalorder %s90, %s92
      %p99 = scmp.eq.s32.totalorder %s26, 1
      %p100 = por %p98, %p99
      %p101 = scmp.ne.s32.totalorder %s92, %s93
      %p102 = scmp.eq.s32.totalorder %s26, 0
      %p103 = por %p101, %p102
      %p104 = scmp.ne.s32.totalorder %s92, %s93
      %p105 = scmp.eq.s32.totalorder %s27, 1
      %p106 = por %p104, %p105
      %p108 = scmp.ne.s32.totalorder %s93, %s107
      %p109 = scmp.eq.s32.totalorder %s27, 0
      %p110 = por %p108, %p109
      %s112 = sadd.s32 %s111, 1
      %p115 = scmp.eq.s32.totalorder %s21, 1
      %p116 = scmp.ne.s32.totalorder %s111, %s113
      %p117 = scmp.eq.s32.totalorder %s21, 0
      %p118 = por %p116, %p117
      %p119 = scmp.ne.s32.totalorder %s111, %s113
      %p120 = scmp.eq.s32.totalorder %s26, 1
      %p121 = por %p119, %p120
      %p122 = scmp.ne.s32.totalorder %s113, %s114
      %p123 = scmp.eq.s32.totalorder %s26, 0
      %p124 = por %p122, %p123
      %p125 = scmp.ne.s32.totalorder %s113, %s114
      %p126 = scmp.eq.s32.totalorder %s27, 1
      %p127 = por %p125, %p126
      %p129 = scmp.ne.s32.totalorder %s114, %s128
      %p130 = scmp.eq.s32.totalorder %s27, 0
      %p131 = por %p129, %p130
      %s133 = sadd.s32 %s132, 1
      %p136 = scmp.eq.s32.totalorder %s21, 1
      %p137 = scmp.ne.s32.totalorder %s132, %s134
      %p138 = scmp.eq.s32.totalorder %s21, 0
      %p139 = por %p137, %p138
      %p140 = scmp.ne.s32.totalorder %s132, %s134
      %p141 = scmp.eq.s32.totalorder %s26, 1
      %p142 = por %p140, %p141
      %p143 = scmp.ne.s32.totalorder %s134, %s135
      %p144 = scmp.eq.s32.totalorder %s26, 0
      %p145 = por %p143, %p144
      %p146 = scmp.ne.s32.totalorder %s134, %s135
      %p147 = scmp.eq.s32.totalorder %s27, 1
      %p148 = por %p146, %p147
      %p150 = scmp.ne.s32.totalorder %s135, %s149
      %p151 = scmp.eq.s32.totalorder %s27, 0
      %p152 = por %p150, %p151
      %s154 = sadd.s32 %s153, 1
      %p157 = scmp.eq.s32.totalorder %s21, 1
      %p158 = scmp.ne.s32.totalorder %s153, %s155
      %p159 = scmp.eq.s32.totalorder %s21, 0
      %p160 = por %p158, %p159
      %p161 = scmp.ne.s32.totalorder %s153, %s155
      %p162 = scmp.eq.s32.totalorder %s26, 1
      %p163 = por %p161, %p162
      %p164 = scmp.ne.s32.totalorder %s155, %s156
      %p165 = scmp.eq.s32.totalorder %s26, 0
      %p166 = por %p164, %p165
      %p167 = scmp.ne.s32.totalorder %s155, %s156
      %p168 = scmp.eq.s32.totalorder %s27, 1
      %p169 = por %p167, %p168
      %p171 = scmp.ne.s32.totalorder %s156, %s170
      %p172 = scmp.eq.s32.totalorder %s27, 0
      %p173 = por %p171, %p172
      %s174 = ssub.s32 %s28, %s40
      %s175 = ssub.s32 %s29, %s36
      %s176 = sor.u32 %s174, %s175
      %p177 = scmp.eq.s32.totalorder %s176, 0
      %s179 = sadd.s32 %s178, 1
      %s180 = scalar_select %p177, %s178, %s179
      %p183 = pneg %p177
      %p184 = scmp.eq.s32.totalorder %s21, 1
      %p185 = por %p183, %p184
      %p186 = scmp.ne.s32.totalorder %s178, %s181
      %p187 = scmp.eq.s32.totalorder %s21, 0
      %p188 = por %p186, %p187
      %p189 = scmp.ne.s32.totalorder %s178, %s181
      %p190 = scmp.eq.s32.totalorder %s26, 1
      %p191 = por %p189, %p190
      %p192 = scmp.ne.s32.totalorder %s181, %s182
      %p193 = scmp.eq.s32.totalorder %s26, 0
      %p194 = por %p192, %p193
      %p195 = scmp.ne.s32.totalorder %s181, %s182
      %p196 = scmp.eq.s32.totalorder %s27, 1
      %p197 = por %p195, %p196
      %p199 = scmp.ne.s32.totalorder %s182, %s198
      %p200 = scmp.eq.s32.totalorder %s27, 0
      %p201 = por %p199, %p200
      %s202 = ssub.s32 %s28, %s40
      %s203 = ssub.s32 %s29, %s36
      %s204 = sor.u32 %s202, %s203
      %p205 = scmp.eq.s32.totalorder %s204, 0
      %s207 = sadd.s32 %s206, 1
      %s208 = scalar_select %p205, %s206, %s207
      %p211 = pneg %p205
      %p212 = scmp.eq.s32.totalorder %s21, 1
      %p213 = por %p211, %p212
      %p214 = scmp.ne.s32.totalorder %s206, %s209
      %p215 = scmp.eq.s32.totalorder %s21, 0
      %p216 = por %p214, %p215
      %p217 = scmp.ne.s32.totalorder %s206, %s209
      %p218 = scmp.eq.s32.totalorder %s26, 1
      %p219 = por %p217, %p218
      %p220 = scmp.ne.s32.totalorder %s209, %s210
      %p221 = scmp.eq.s32.totalorder %s26, 0
      %p222 = por %p220, %p221
      %p223 = scmp.ne.s32.totalorder %s209, %s210
      %p224 = scmp.eq.s32.totalorder %s27, 1
      %p225 = por %p223, %p224
      %p227 = scmp.ne.s32.totalorder %s210, %s226
      %p228 = scmp.eq.s32.totalorder %s27, 0
      %p229 = por %p227, %p228
      %s230 = ssub.s32 %s28, %s40
      %s231 = ssub.s32 %s29, %s36
      %s232 = sor.u32 %s230, %s231
      %p233 = scmp.eq.s32.totalorder %s232, 0
      %s235 = sadd.s32 %s234, 1
      %s236 = scalar_select %p233, %s234, %s235
      %p239 = pneg %p233
      %p240 = scmp.eq.s32.totalorder %s21, 1
      %p241 = por %p239, %p240
      %p242 = scmp.ne.s32.totalorder %s234, %s237
      %p243 = scmp.eq.s32.totalorder %s21, 0
      %p244 = por %p242, %p243
      %p245 = scmp.ne.s32.totalorder %s234, %s237
      %p246 = scmp.eq.s32.totalorder %s26, 1
      %p247 = por %p245, %p246
      %p248 = scmp.ne.s32.totalorder %s237, %s238
      %p249 = scmp.eq.s32.totalorder %s26, 0
      %p250 = por %p248, %p249
      %p251 = scmp.ne.s32.totalorder %s237, %s238
      %p252 = scmp.eq.s32.totalorder %s27, 1
      %p253 = por %p251, %p252
      %p255 = scmp.ne.s32.totalorder %s238, %s254
      %p256 = scmp.eq.s32.totalorder %s27, 0
      %p257 = por %p255, %p256
      %p258 = scmp.le.s32.totalorder 1, %s21
      %p259 = scmp.lt.s32.totalorder %s21, 3
      %p260 = pnand %p258, %p259
      %p261 = pneg %p260
      // Predicated region
      $region9: #{tpu_custom_call.1} parent=5 // pred_check
        _
      $region10: #{tpu_custom_call.1} parent=5 // pred_check_branch
        %263 = sbr.rel (%p260) target = $region12
      $region11: #{tpu_custom_call.1} parent=5 // pred_region
        %s264 = ssub.s32 %s21, 1
        // Predicated region
        $region13: #{tpu_custom_call.1} parent=11 // pred_check
          %p265 = pneg %p82
        $region14: #{tpu_custom_call.1} parent=11 // pred_check_branch
          %267 = sbr.rel (%p265) target = $region16
        $region15: #{tpu_custom_call.1} parent=11 // pred_region
          _
        $region16: #{tpu_custom_call.1} parent=11 // pred_fallthru
          _
        // Predicated region
        $region17: #{tpu_custom_call.1} parent=11 // pred_check
          %p268 = pneg %p103
        $region18: #{tpu_custom_call.1} parent=11 // pred_check_branch
          %270 = sbr.rel (%p268) target = $region20
        $region19: #{tpu_custom_call.1} parent=11 // pred_region
          _
        $region20: #{tpu_custom_call.1} parent=11 // pred_fallthru
          _
        // Predicated region
        $region21: #{tpu_custom_call.1} parent=11 // pred_check
          %p271 = pneg %p124
        $region22: #{tpu_custom_call.1} parent=11 // pred_check_branch
          %273 = sbr.rel (%p271) target = $region24
        $region23: #{tpu_custom_call.1} parent=11 // pred_region
          _
        $region24: #{tpu_custom_call.1} parent=11 // pred_fallthru
          _
        // Predicated region
        $region25: #{tpu_custom_call.1} parent=11 // pred_check
          %p274 = pneg %p145
        $region26: #{tpu_custom_call.1} parent=11 // pred_check_branch
          %276 = sbr.rel (%p274) target = $region28
        $region27: #{tpu_custom_call.1} parent=11 // pred_region
          _
        $region28: #{tpu_custom_call.1} parent=11 // pred_fallthru
          _
        // Predicated region
        $region29: #{tpu_custom_call.1} parent=11 // pred_check
          %p277 = pneg %p166
        $region30: #{tpu_custom_call.1} parent=11 // pred_check_branch
          %279 = sbr.rel (%p277) target = $region32
        $region31: #{tpu_custom_call.1} parent=11 // pred_region
          _
        $region32: #{tpu_custom_call.1} parent=11 // pred_fallthru
          _
      $region12: #{tpu_custom_call.1} parent=5 // pred_fallthru
        _
      %p280 = scmp.lt.s32.totalorder %s21, 2
      // Predicated region
      $region33: #{tpu_custom_call.1} parent=5 // pred_check
        %p281 = pneg %p280
      $region34: #{tpu_custom_call.1} parent=5 // pred_check_branch
        %283 = sbr.rel (%p281) target = $region36
      $region35: #{tpu_custom_call.1} parent=5 // pred_region
        // Predicated region
        $region37: #{tpu_custom_call.1} parent=35 // pred_check
          %p284 = pneg %p55
        $region38: #{tpu_custom_call.1} parent=35 // pred_check_branch
          %286 = sbr.rel (%p284) target = $region40
        $region39: #{tpu_custom_call.1} parent=35 // pred_region
          %p287 = scmp.lt.s32.totalorder %s28, 1
          %s288 = scalar_select %p287, %s28, 1
          %p289 = scmp.lt.s32.totalorder %s29, 0
          %s290 = scalar_select %p289, %s29, 0
          %s291 = sadd.s32 %s290, %s288
          %s292 = smul.addr %s291, 8
          %s293 = scalar_lea.vmem %s0, %s292
        $region40: #{tpu_custom_call.1} parent=35 // pred_fallthru
          _
      $region36: #{tpu_custom_call.1} parent=5 // pred_fallthru
        _
      %p294 = scmp.le.s32.totalorder 1, %s21
      %p295 = scmp.lt.s32.totalorder %s21, 3
      %p296 = pnand %p294, %p295
      %p297 = pneg %p296
      // Predicated region
      $region41: #{tpu_custom_call.1} parent=5 // pred_check
        _
      $region42: #{tpu_custom_call.1} parent=5 // pred_check_branch
        %299 = sbr.rel (%p296) target = $region44
      $region43: #{tpu_custom_call.1} parent=5 // pred_region
        %s300 = ssub.s32 %s21, 1
        %p301 = scmp.lt.s32.totalorder %s30, 1
        %s302 = scalar_select %p301, %s30, 1
        %p303 = scmp.lt.s32.totalorder %s31, 0
        %s304 = scalar_select %p303, %s31, 0
        %s305 = sadd.s32 %s304, %s302
        %s306 = smul.addr %s305, 8
        %s307 = scalar_lea.vmem %s0, %s306
        %p308 = pneg %p61
        %p309 = pneg %p58
        %p310 = pneg %p82
        %p311 = pneg %p79
        %p312 = pneg %p103
        %p313 = pneg %p100
        %p314 = pneg %p124
        %p315 = pneg %p121
        %p316 = pneg %p145
        %p317 = pneg %p142
        %p318 = pneg %p166
        %p319 = pneg %p163
        %p320 = pneg %p194
        %p321 = pneg %p191
        %s322 = sand.u32 %s181, 1
        %s323 = scalar_lea.sflag [#allocation3], %s322
        %s324 = sand.u32 %s181, 1
        %s325 = smul.addr %s324, 16
        %s326 = scalar_lea.vmem [#allocation2], %s325
        %p327 = pneg %p222
        %p328 = pneg %p219
        %s329 = sand.u32 %s26, 1
        %s330 = scalar_lea.sflag [#allocation5], %s329
        %s331 = sand.u32 %s209, 1
        %s332 = smul.addr %s331, 16
        %s333 = scalar_lea.vmem [#allocation4], %s332
        %p334 = pneg %p250
        %p335 = pneg %p247
        %s336 = sand.u32 %s26, 1
        %s337 = scalar_lea.sflag [#allocation5], %s336
        %s338 = sand.u32 %s237, 1
        %s339 = smul.addr %s338, 16
        %s340 = scalar_lea.vmem [#allocation6], %s339
        %p341 = scmp.lt.s32.totalorder %s30, 1
        %s342 = scalar_select %p341, %s30, 1
        %p343 = scmp.lt.s32.totalorder %s31, 0
        %s344 = scalar_select %p343, %s31, 0
        %s345 = sadd.s32 %s344, %s342
        %s346 = smul.addr %s345, 8
        %s347 = scalar_lea.vmem %s0, %s346
        %v349 = vld [vmem:[%s347] sm:$0xff]
        %vm350 = vcmask 261120
        %v351 = vsel %vm350, %v349, 0.0
        %352 = vadd.xlane.f32.xlu0 %v351
        %v353 = vpop.xlane.xlu0 %352
        %v354 = vrcp.pop 32.0
        %v355 = vmul.f32 %v353, %v354
        %v356 = vsub.f32 %v349, %v355
        %v357 = vmul.f32 %v356, %v356
        %v358 = vsel %vm350, %v357, 0.0
        %359 = vadd.xlane.f32.xlu0 %v358
        %v360 = vpop.xlane.xlu0 %359
        %v361 = vmul.f32 %v360, %v354
        %v362 = vadd.f32 %v361, 1e-05
        %v363 = vrsqrt.pop %v362
        %v364 = vmul.f32 %v356, %v363
        %v365 = vld [vmem:[%s1] sm:$0x1]
        %v367 = vlaneseq
        %v368 = vshrl.u32 %v367, 7
        %v369 = vsub.s32 0, %v368
        %v370 = vrot.slane %v365, %v369
        %v372 = vmul.f32 %v364, %v370
        %v373 = vld [vmem:[%s2] sm:$0x1]
        %v375 = vlaneseq
        %v376 = vshrl.u32 %v375, 7
        %v377 = vsub.s32 0, %v376
        %v378 = vrot.slane %v373, %v377
        %v380 = vadd.f32 %v372, %v378
        %v381 = vpack.c.bf16 %v380, %v380
        %v382 = vld [vmem:[%s3] sm:$0xf]
        %v383 = vld [vmem:[%s3 + $0x4] sm:$0xf]
        %v384 = vld [vmem:[%s3 + $0x8] sm:$0xf]
        %v385 = vld [vmem:[%s3 + $0xc] sm:$0xf]
        %v390 = vunpack.c.l.b16 %v382
        %v391 = vunpack.c.l.b16 %v383
        %v392 = vunpack.c.l.b16 %v384
        %v393 = vunpack.c.l.b16 %v385
        %v394 = vpack.c.b16 %v391, %v390
        %v395 = vpack.c.b16 %v393, %v392
        %v399 = vsel %vm350, %v381, 0
        %401 = vmatprep.subr.bf16.mxu0 0
        %402 = vmatpush1.bf16.msra.mxu0 %v394
        %403 = vmatprep.subr.bf16.mxu0 0
        %404 = vmatpush1.bf16.msra.mxu0 %v395
        %405 = vmatprep.subr.bf16.mxu0 0
        %406 = vmatpush1.bf16.msra.mxu0 0
        %407 = vmatprep.subr.bf16.mxu0 0
        %408 = vmatpush1.bf16.msra.mxu0 0
        %409 = vmatprep.subr.bf16.mxu0 0
        %410 = vmatpush1.bf16.msra.mxu0 0
        %411 = vmatprep.subr.bf16.mxu0 0
        %412 = vmatpush1.bf16.msra.mxu0 0
        %413 = vmatprep.subr.bf16.mxu0 0
        %414 = vmatpush1.bf16.msra.mxu0 0
        %415 = vmatprep.subr.bf16.mxu0 0
        %416 = vmatpush1.bf16.msra.mxu0 0
        %417 = vmatprep.subr.bf16.mxu0 0
        %418 = vmatpush1.bf16.msra.mxu0 0
        %419 = vmatprep.subr.bf16.mxu0 0
        %420 = vmatpush1.bf16.msra.mxu0 0
        %421 = vmatprep.subr.bf16.mxu0 0
        %422 = vmatpush1.bf16.msra.mxu0 0
        %423 = vmatprep.subr.bf16.mxu0 0
        %424 = vmatpush1.bf16.msra.mxu0 0
        %425 = vmatprep.subr.bf16.mxu0 0
        %426 = vmatpush1.bf16.msra.mxu0 0
        %427 = vmatprep.subr.bf16.mxu0 0
        %428 = vmatpush1.bf16.msra.mxu0 0
        %429 = vmatprep.subr.bf16.mxu0 0
        %430 = vmatpush1.bf16.msra.mxu0 0
        %431 = vmatprep.subr.bf16.mxu0 0
        %432 = vmatpush1.bf16.msra.mxu0 0
        %433 = vmatprep.mubr.bf16.mxu0 0
        %434 = vmatmul.mubr.bf16.gmra.mrb[0].mxu0 %v399
        %v435 = vpop.f32.mrb[0].mxu0
        %v436 = vadd.f32 0.0, %v435
        %v437 = vpop.f32.mrb[0].mxu0
        %v438 = vpop.f32.mrb[0].mxu0
        %v439 = vpop.f32.mrb[0].mxu0
        %440 = vdwg.mxu0
        %v441 = vpack.c.bf16 %v436, %v436
        %vm442 = vcmask 60416
        %443 = vst.msk [vmem:[%s326] sm:$0xf] %vm442, %v441
        %s444 = scalar_lea.vmem %s3, 16
        %v445 = vld [vmem:[%s444] sm:$0xf]
        %v446 = vld [vmem:[%s444 + $0x4] sm:$0xf]
        %v447 = vld [vmem:[%s444 + $0x8] sm:$0xf]
        %v448 = vld [vmem:[%s444 + $0xc] sm:$0xf]
        %v453 = vunpack.c.l.b16 %v445
        %v454 = vunpack.c.l.b16 %v446
        %v455 = vunpack.c.l.b16 %v447
        %v456 = vunpack.c.l.b16 %v448
        %v457 = vpack.c.b16 %v454, %v453
        %v458 = vpack.c.b16 %v456, %v455
        %461 = vmatprep.subr.bf16.mxu0 0
        %462 = vmatpush1.bf16.msra.mxu0 %v457
        %463 = vmatprep.subr.bf16.mxu0 0
        %464 = vmatpush1.bf16.msra.mxu0 %v458
        %465 = vmatprep.subr.bf16.mxu0 0
        %466 = vmatpush1.bf16.msra.mxu0 0
        %467 = vmatprep.subr.bf16.mxu0 0
        %468 = vmatpush1.bf16.msra.mxu0 0
        %469 = vmatprep.subr.bf16.mxu0 0
        %470 = vmatpush1.bf16.msra.mxu0 0
        %471 = vmatprep.subr.bf16.mxu0 0
        %472 = vmatpush1.bf16.msra.mxu0 0
        %473 = vmatprep.subr.bf16.mxu0 0
        %474 = vmatpush1.bf16.msra.mxu0 0
        %475 = vmatprep.subr.bf16.mxu0 0
        %476 = vmatpush1.bf16.msra.mxu0 0
        %477 = vmatprep.subr.bf16.mxu0 0
        %478 = vmatpush1.bf16.msra.mxu0 0
        %479 = vmatprep.subr.bf16.mxu0 0
        %480 = vmatpush1.bf16.msra.mxu0 0
        %481 = vmatprep.subr.bf16.mxu0 0
        %482 = vmatpush1.bf16.msra.mxu0 0
        %483 = vmatprep.subr.bf16.mxu0 0
        %484 = vmatpush1.bf16.msra.mxu0 0
        %485 = vmatprep.subr.bf16.mxu0 0
        %486 = vmatpush1.bf16.msra.mxu0 0
        %487 = vmatprep.subr.bf16.mxu0 0
        %488 = vmatpush1.bf16.msra.mxu0 0
        %489 = vmatprep.subr.bf16.mxu0 0
        %490 = vmatpush1.bf16.msra.mxu0 0
        %491 = vmatprep.subr.bf16.mxu0 0
        %492 = vmatpush1.bf16.msra.mxu0 0
        %493 = vmatprep.mubr.bf16.mxu0 0
        %494 = vmatmul.mubr.bf16.gmra.mrb[0].mxu0 %v399
        %v495 = vpop.f32.mrb[0].mxu0
        %v496 = vadd.f32 0.0, %v495
        %v497 = vpop.f32.mrb[0].mxu0
        %v498 = vpop.f32.mrb[0].mxu0
        %v499 = vpop.f32.mrb[0].mxu0
        %500 = vdwg.mxu0
        %v501 = vpack.c.bf16 %v496, %v496
        %s502 = scalar_lea.vmem %s326, 4 [#allocation2]
        %503 = vst.msk [vmem:[%s502] sm:$0xf] %vm442, %v501
        %s504 = scalar_lea.vmem %s3, 32
        %v505 = vld [vmem:[%s504] sm:$0xf]
        %v506 = vld [vmem:[%s504 + $0x4] sm:$0xf]
        %v507 = vld [vmem:[%s504 + $0x8] sm:$0xf]
        %v508 = vld [vmem:[%s504 + $0xc] sm:$0xf]
        %v513 = vunpack.c.l.b16 %v505
        %v514 = vunpack.c.l.b16 %v506
        %v515 = vunpack.c.l.b16 %v507
        %v516 = vunpack.c.l.b16 %v508
        %v517 = vpack.c.b16 %v514, %v513
        %v518 = vpack.c.b16 %v516, %v515
        %521 = vmatprep.subr.bf16.mxu0 0
        %522 = vmatpush1.bf16.msra.mxu0 %v517
        %523 = vmatprep.subr.bf16.mxu0 0
        %524 = vmatpush1.bf16.msra.mxu0 %v518
        %525 = vmatprep.subr.bf16.mxu0 0
        %526 = vmatpush1.bf16.msra.mxu0 0
        %527 = vmatprep.subr.bf16.mxu0 0
        %528 = vmatpush1.bf16.msra.mxu0 0
        %529 = vmatprep.subr.bf16.mxu0 0
        %530 = vmatpush1.bf16.msra.mxu0 0
        %531 = vmatprep.subr.bf16.mxu0 0
        %532 = vmatpush1.bf16.msra.mxu0 0
        %533 = vmatprep.subr.bf16.mxu0 0
        %534 = vmatpush1.bf16.msra.mxu0 0
        %535 = vmatprep.subr.bf16.mxu0 0
        %536 = vmatpush1.bf16.msra.mxu0 0
        %537 = vmatprep.subr.bf16.mxu0 0
        %538 = vmatpush1.bf16.msra.mxu0 0
        %539 = vmatprep.subr.bf16.mxu0 0
        %540 = vmatpush1.bf16.msra.mxu0 0
        %541 = vmatprep.subr.bf16.mxu0 0
        %542 = vmatpush1.bf16.msra.mxu0 0
        %543 = vmatprep.subr.bf16.mxu0 0
        %544 = vmatpush1.bf16.msra.mxu0 0
        %545 = vmatprep.subr.bf16.mxu0 0
        %546 = vmatpush1.bf16.msra.mxu0 0
        %547 = vmatprep.subr.bf16.mxu0 0
        %548 = vmatpush1.bf16.msra.mxu0 0
        %549 = vmatprep.subr.bf16.mxu0 0
        %550 = vmatpush1.bf16.msra.mxu0 0
        %551 = vmatprep.subr.bf16.mxu0 0
        %552 = vmatpush1.bf16.msra.mxu0 0
        %553 = vmatprep.mubr.bf16.mxu0 0
        %554 = vmatmul.mubr.bf16.gmra.mrb[0].mxu0 %v399
        %v555 = vpop.f32.mrb[0].mxu0
        %v556 = vadd.f32 0.0, %v555
        %v557 = vpop.f32.mrb[0].mxu0
        %v558 = vpop.f32.mrb[0].mxu0
        %v559 = vpop.f32.mrb[0].mxu0
        %560 = vdwg.mxu0
        %v561 = vpack.c.bf16 %v556, %v556
        %s562 = scalar_lea.vmem %s326, 8 [#allocation2]
        %563 = vst.msk [vmem:[%s562] sm:$0xf] %vm442, %v561
        %s564 = scalar_lea.vmem %s3, 48
        %v565 = vld [vmem:[%s564] sm:$0xf]
        %v566 = vld [vmem:[%s564 + $0x4] sm:$0xf]
        %v567 = vld [vmem:[%s564 + $0x8] sm:$0xf]
        %v568 = vld [vmem:[%s564 + $0xc] sm:$0xf]
        %v573 = vunpack.c.l.b16 %v565
        %v574 = vunpack.c.l.b16 %v566
        %v575 = vunpack.c.l.b16 %v567
        %v576 = vunpack.c.l.b16 %v568
        %v577 = vpack.c.b16 %v574, %v573
        %v578 = vpack.c.b16 %v576, %v575
        %581 = vmatprep.subr.bf16.mxu0 0
        %582 = vmatpush1.bf16.msra.mxu0 %v577
        %583 = vmatprep.subr.bf16.mxu0 0
        %584 = vmatpush1.bf16.msra.mxu0 %v578
        %585 = vmatprep.subr.bf16.mxu0 0
        %586 = vmatpush1.bf16.msra.mxu0 0
        %587 = vmatprep.subr.bf16.mxu0 0
        %588 = vmatpush1.bf16.msra.mxu0 0
        %589 = vmatprep.subr.bf16.mxu0 0
        %590 = vmatpush1.bf16.msra.mxu0 0
        %591 = vmatprep.subr.bf16.mxu0 0
        %592 = vmatpush1.bf16.msra.mxu0 0
        %593 = vmatprep.subr.bf16.mxu0 0
        %594 = vmatpush1.bf16.msra.mxu0 0
        %595 = vmatprep.subr.bf16.mxu0 0
        %596 = vmatpush1.bf16.msra.mxu0 0
        %597 = vmatprep.subr.bf16.mxu0 0
        %598 = vmatpush1.bf16.msra.mxu0 0
        %599 = vmatprep.subr.bf16.mxu0 0
        %600 = vmatpush1.bf16.msra.mxu0 0
        %601 = vmatprep.subr.bf16.mxu0 0
        %602 = vmatpush1.bf16.msra.mxu0 0
        %603 = vmatprep.subr.bf16.mxu0 0
        %604 = vmatpush1.bf16.msra.mxu0 0
        %605 = vmatprep.subr.bf16.mxu0 0
        %606 = vmatpush1.bf16.msra.mxu0 0
        %607 = vmatprep.subr.bf16.mxu0 0
        %608 = vmatpush1.bf16.msra.mxu0 0
        %609 = vmatprep.subr.bf16.mxu0 0
        %610 = vmatpush1.bf16.msra.mxu0 0
        %611 = vmatprep.subr.bf16.mxu0 0
        %612 = vmatpush1.bf16.msra.mxu0 0
        %613 = vmatprep.mubr.bf16.mxu0 0
        %614 = vmatmul.mubr.bf16.gmra.mrb[0].mxu0 %v399
        %v615 = vpop.f32.mrb[0].mxu0
        %v616 = vadd.f32 0.0, %v615
        %v617 = vpop.f32.mrb[0].mxu0
        %v618 = vpop.f32.mrb[0].mxu0
        %v619 = vpop.f32.mrb[0].mxu0
        %620 = vdwg.mxu0
        %v621 = vpack.c.bf16 %v616, %v616
        %s622 = scalar_lea.vmem %s326, 12 [#allocation2]
        %623 = vst.msk [vmem:[%s622] sm:$0xf] %vm442, %v621
        %v624 = vld [vmem:[%s4] sm:$0xf]
        %v625 = vld [vmem:[%s4 + $0x4] sm:$0xf]
        %v626 = vld [vmem:[%s4 + $0x8] sm:$0xf]
        %v627 = vld [vmem:[%s4 + $0xc] sm:$0xf]
        %v632 = vunpack.c.l.b16 %v624
        %v633 = vunpack.c.l.b16 %v625
        %v634 = vunpack.c.l.b16 %v626
        %v635 = vunpack.c.l.b16 %v627
        %v636 = vpack.c.b16 %v633, %v632
        %v637 = vpack.c.b16 %v635, %v634
        %640 = vmatprep.subr.bf16.mxu0 0
        %641 = vmatpush1.bf16.msra.mxu0 %v636
        %642 = vmatprep.subr.bf16.mxu0 0
        %643 = vmatpush1.bf16.msra.mxu0 %v637
        %644 = vmatprep.subr.bf16.mxu0 0
        %645 = vmatpush1.bf16.msra.mxu0 0
        %646 = vmatprep.subr.bf16.mxu0 0
        %647 = vmatpush1.bf16.msra.mxu0 0
        %648 = vmatprep.subr.bf16.mxu0 0
        %649 = vmatpush1.bf16.msra.mxu0 0
        %650 = vmatprep.subr.bf16.mxu0 0
        %651 = vmatpush1.bf16.msra.mxu0 0
        %652 = vmatprep.subr.bf16.mxu0 0
        %653 = vmatpush1.bf16.msra.mxu0 0
        %654 = vmatprep.subr.bf16.mxu0 0
        %655 = vmatpush1.bf16.msra.mxu0 0
        %656 = vmatprep.subr.bf16.mxu0 0
        %657 = vmatpush1.bf16.msra.mxu0 0
        %658 = vmatprep.subr.bf16.mxu0 0
        %659 = vmatpush1.bf16.msra.mxu0 0
        %660 = vmatprep.subr.bf16.mxu0 0
        %661 = vmatpush1.bf16.msra.mxu0 0
        %662 = vmatprep.subr.bf16.mxu0 0
        %663 = vmatpush1.bf16.msra.mxu0 0
        %664 = vmatprep.subr.bf16.mxu0 0
        %665 = vmatpush1.bf16.msra.mxu0 0
        %666 = vmatprep.subr.bf16.mxu0 0
        %667 = vmatpush1.bf16.msra.mxu0 0
        %668 = vmatprep.subr.bf16.mxu0 0
        %669 = vmatpush1.bf16.msra.mxu0 0
        %670 = vmatprep.subr.bf16.mxu0 0
        %671 = vmatpush1.bf16.msra.mxu0 0
        %672 = vmatprep.mubr.bf16.mxu0 0
        %673 = vmatmul.mubr.bf16.gmra.mrb[0].mxu0 %v399
        %v674 = vpop.f32.mrb[0].mxu0
        %v675 = vadd.f32 0.0, %v674
        %v676 = vpop.f32.mrb[0].mxu0
        %v677 = vpop.f32.mrb[0].mxu0
        %v678 = vpop.f32.mrb[0].mxu0
        %679 = vdwg.mxu0
        %v680 = vpack.c.bf16 %v675, %v675
        %681 = vst.msk [vmem:[%s333] sm:$0xf] %vm442, %v680
        %s682 = scalar_lea.vmem %s4, 16
        %v683 = vld [vmem:[%s682] sm:$0xf]
        %v684 = vld [vmem:[%s682 + $0x4] sm:$0xf]
        %v685 = vld [vmem:[%s682 + $0x8] sm:$0xf]
        %v686 = vld [vmem:[%s682 + $0xc] sm:$0xf]
        %v691 = vunpack.c.l.b16 %v683
        %v692 = vunpack.c.l.b16 %v684
        %v693 = vunpack.c.l.b16 %v685
        %v694 = vunpack.c.l.b16 %v686
        %v695 = vpack.c.b16 %v692, %v691
        %v696 = vpack.c.b16 %v694, %v693
        %699 = vmatprep.subr.bf16.mxu0 0
        %700 = vmatpush1.bf16.msra.mxu0 %v695
        %701 = vmatprep.subr.bf16.mxu0 0
        %702 = vmatpush1.bf16.msra.mxu0 %v696
        %703 = vmatprep.subr.bf16.mxu0 0
        %704 = vmatpush1.bf16.msra.mxu0 0
        %705 = vmatprep.subr.bf16.mxu0 0
        %706 = vmatpush1.bf16.msra.mxu0 0
        %707 = vmatprep.subr.bf16.mxu0 0
        %708 = vmatpush1.bf16.msra.mxu0 0
        %709 = vmatprep.subr.bf16.mxu0 0
        %710 = vmatpush1.bf16.msra.mxu0 0
        %711 = vmatprep.subr.bf16.mxu0 0
        %712 = vmatpush1.bf16.msra.mxu0 0
        %713 = vmatprep.subr.bf16.mxu0 0
        %714 = vmatpush1.bf16.msra.mxu0 0
        %715 = vmatprep.subr.bf16.mxu0 0
        %716 = vmatpush1.bf16.msra.mxu0 0
        %717 = vmatprep.subr.bf16.mxu0 0
        %718 = vmatpush1.bf16.msra.mxu0 0
        %719 = vmatprep.subr.bf16.mxu0 0
        %720 = vmatpush1.bf16.msra.mxu0 0
        %721 = vmatprep.subr.bf16.mxu0 0
        %722 = vmatpush1.bf16.msra.mxu0 0
        %723 = vmatprep.subr.bf16.mxu0 0
        %724 = vmatpush1.bf16.msra.mxu0 0
        %725 = vmatprep.subr.bf16.mxu0 0
        %726 = vmatpush1.bf16.msra.mxu0 0
        %727 = vmatprep.subr.bf16.mxu0 0
        %728 = vmatpush1.bf16.msra.mxu0 0
        %729 = vmatprep.subr.bf16.mxu0 0
        %730 = vmatpush1.bf16.msra.mxu0 0
        %731 = vmatprep.mubr.bf16.mxu0 0
        %732 = vmatmul.mubr.bf16.gmra.mrb[0].mxu0 %v399
        %v733 = vpop.f32.mrb[0].mxu0
        %v734 = vadd.f32 0.0, %v733
        %v735 = vpop.f32.mrb[0].mxu0
        %v736 = vpop.f32.mrb[0].mxu0
        %v737 = vpop.f32.mrb[0].mxu0
        %738 = vdwg.mxu0
        %v739 = vpack.c.bf16 %v734, %v734
        %s740 = scalar_lea.vmem %s333, 4 [#allocation4]
        %741 = vst.msk [vmem:[%s740] sm:$0xf] %vm442, %v739
        %s742 = scalar_lea.vmem %s4, 32
        %v743 = vld [vmem:[%s742] sm:$0xf]
        %v744 = vld [vmem:[%s742 + $0x4] sm:$0xf]
        %v745 = vld [vmem:[%s742 + $0x8] sm:$0xf]
        %v746 = vld [vmem:[%s742 + $0xc] sm:$0xf]
        %v751 = vunpack.c.l.b16 %v743
        %v752 = vunpack.c.l.b16 %v744
        %v753 = vunpack.c.l.b16 %v745
        %v754 = vunpack.c.l.b16 %v746
        %v755 = vpack.c.b16 %v752, %v751
        %v756 = vpack.c.b16 %v754, %v753
        %759 = vmatprep.subr.bf16.mxu0 0
        %760 = vmatpush1.bf16.msra.mxu0 %v755
        %761 = vmatprep.subr.bf16.mxu0 0
        %762 = vmatpush1.bf16.msra.mxu0 %v756
        %763 = vmatprep.subr.bf16.mxu0 0
        %764 = vmatpush1.bf16.msra.mxu0 0
        %765 = vmatprep.subr.bf16.mxu0 0
        %766 = vmatpush1.bf16.msra.mxu0 0
        %767 = vmatprep.subr.bf16.mxu0 0
        %768 = vmatpush1.bf16.msra.mxu0 0
        %769 = vmatprep.subr.bf16.mxu0 0
        %770 = vmatpush1.bf16.msra.mxu0 0
        %771 = vmatprep.subr.bf16.mxu0 0
        %772 = vmatpush1.bf16.msra.mxu0 0
        %773 = vmatprep.subr.bf16.mxu0 0
        %774 = vmatpush1.bf16.msra.mxu0 0
        %775 = vmatprep.subr.bf16.mxu0 0
        %776 = vmatpush1.bf16.msra.mxu0 0
        %777 = vmatprep.subr.bf16.mxu0 0
        %778 = vmatpush1.bf16.msra.mxu0 0
        %779 = vmatprep.subr.bf16.mxu0 0
        %780 = vmatpush1.bf16.msra.mxu0 0
        %781 = vmatprep.subr.bf16.mxu0 0
        %782 = vmatpush1.bf16.msra.mxu0 0
        %783 = vmatprep.subr.bf16.mxu0 0
        %784 = vmatpush1.bf16.msra.mxu0 0
        %785 = vmatprep.subr.bf16.mxu0 0
        %786 = vmatpush1.bf16.msra.mxu0 0
        %787 = vmatprep.subr.bf16.mxu0 0
        %788 = vmatpush1.bf16.msra.mxu0 0
        %789 = vmatprep.subr.bf16.mxu0 0
        %790 = vmatpush1.bf16.msra.mxu0 0
        %791 = vmatprep.mubr.bf16.mxu0 0
        %792 = vmatmul.mubr.bf16.gmra.mrb[0].mxu0 %v399
        %v793 = vpop.f32.mrb[0].mxu0
        %v794 = vadd.f32 0.0, %v793
        %v795 = vpop.f32.mrb[0].mxu0
        %v796 = vpop.f32.mrb[0].mxu0
        %v797 = vpop.f32.mrb[0].mxu0
        %798 = vdwg.mxu0
        %v799 = vpack.c.bf16 %v794, %v794
        %s800 = scalar_lea.vmem %s333, 8 [#allocation4]
        %801 = vst.msk [vmem:[%s800] sm:$0xf] %vm442, %v799
        %s802 = scalar_lea.vmem %s4, 48
        %v803 = vld [vmem:[%s802] sm:$0xf]
        %v804 = vld [vmem:[%s802 + $0x4] sm:$0xf]
        %v805 = vld [vmem:[%s802 + $0x8] sm:$0xf]
        %v806 = vld [vmem:[%s802 + $0xc] sm:$0xf]
        %v811 = vunpack.c.l.b16 %v803
        %v812 = vunpack.c.l.b16 %v804
        %v813 = vunpack.c.l.b16 %v805
        %v814 = vunpack.c.l.b16 %v806
        %v815 = vpack.c.b16 %v812, %v811
        %v816 = vpack.c.b16 %v814, %v813
        %819 = vmatprep.subr.bf16.mxu0 0
        %820 = vmatpush1.bf16.msra.mxu0 %v815
        %821 = vmatprep.subr.bf16.mxu0 0
        %822 = vmatpush1.bf16.msra.mxu0 %v816
        %823 = vmatprep.subr.bf16.mxu0 0
        %824 = vmatpush1.bf16.msra.mxu0 0
        %825 = vmatprep.subr.bf16.mxu0 0
        %826 = vmatpush1.bf16.msra.mxu0 0
        %827 = vmatprep.subr.bf16.mxu0 0
        %828 = vmatpush1.bf16.msra.mxu0 0
        %829 = vmatprep.subr.bf16.mxu0 0
        %830 = vmatpush1.bf16.msra.mxu0 0
        %831 = vmatprep.subr.bf16.mxu0 0
        %832 = vmatpush1.bf16.msra.mxu0 0
        %833 = vmatprep.subr.bf16.mxu0 0
        %834 = vmatpush1.bf16.msra.mxu0 0
        %835 = vmatprep.subr.bf16.mxu0 0
        %836 = vmatpush1.bf16.msra.mxu0 0
        %837 = vmatprep.subr.bf16.mxu0 0
        %838 = vmatpush1.bf16.msra.mxu0 0
        %839 = vmatprep.subr.bf16.mxu0 0
        %840 = vmatpush1.bf16.msra.mxu0 0
        %841 = vmatprep.subr.bf16.mxu0 0
        %842 = vmatpush1.bf16.msra.mxu0 0
        %843 = vmatprep.subr.bf16.mxu0 0
        %844 = vmatpush1.bf16.msra.mxu0 0
        %845 = vmatprep.subr.bf16.mxu0 0
        %846 = vmatpush1.bf16.msra.mxu0 0
        %847 = vmatprep.subr.bf16.mxu0 0
        %848 = vmatpush1.bf16.msra.mxu0 0
        %849 = vmatprep.subr.bf16.mxu0 0
        %850 = vmatpush1.bf16.msra.mxu0 0
        %851 = vmatprep.mubr.bf16.mxu0 0
        %852 = vmatmul.mubr.bf16.gmra.mrb[0].mxu0 %v399
        %v853 = vpop.f32.mrb[0].mxu0
        %v854 = vadd.f32 0.0, %v853
        %v855 = vpop.f32.mrb[0].mxu0
        %v856 = vpop.f32.mrb[0].mxu0
        %v857 = vpop.f32.mrb[0].mxu0
        %858 = vdwg.mxu0
        %v859 = vpack.c.bf16 %v854, %v854
        %s860 = scalar_lea.vmem %s333, 12 [#allocation4]
        %861 = vst.msk [vmem:[%s860] sm:$0xf] %vm442, %v859
        %v862 = vld [vmem:[%s5] sm:$0xf]
        %v863 = vld [vmem:[%s5 + $0x4] sm:$0xf]
        %v864 = vld [vmem:[%s5 + $0x8] sm:$0xf]
        %v865 = vld [vmem:[%s5 + $0xc] sm:$0xf]
        %v870 = vunpack.c.l.b16 %v862
        %v871 = vunpack.c.l.b16 %v863
        %v872 = vunpack.c.l.b16 %v864
        %v873 = vunpack.c.l.b16 %v865
        %v874 = vpack.c.b16 %v871, %v870
        %v875 = vpack.c.b16 %v873, %v872
        %878 = vmatprep.subr.bf16.mxu0 0
        %879 = vmatpush1.bf16.msra.mxu0 %v874
        %880 = vmatprep.subr.bf16.mxu0 0
        %881 = vmatpush1.bf16.msra.mxu0 %v875
        %882 = vmatprep.subr.bf16.mxu0 0
        %883 = vmatpush1.bf16.msra.mxu0 0
        %884 = vmatprep.subr.bf16.mxu0 0
        %885 = vmatpush1.bf16.msra.mxu0 0
        %886 = vmatprep.subr.bf16.mxu0 0
        %887 = vmatpush1.bf16.msra.mxu0 0
        %888 = vmatprep.subr.bf16.mxu0 0
        %889 = vmatpush1.bf16.msra.mxu0 0
        %890 = vmatprep.subr.bf16.mxu0 0
        %891 = vmatpush1.bf16.msra.mxu0 0
        %892 = vmatprep.subr.bf16.mxu0 0
        %893 = vmatpush1.bf16.msra.mxu0 0
        %894 = vmatprep.subr.bf16.mxu0 0
        %895 = vmatpush1.bf16.msra.mxu0 0
        %896 = vmatprep.subr.bf16.mxu0 0
        %897 = vmatpush1.bf16.msra.mxu0 0
        %898 = vmatprep.subr.bf16.mxu0 0
        %899 = vmatpush1.bf16.msra.mxu0 0
        %900 = vmatprep.subr.bf16.mxu0 0
        %901 = vmatpush1.bf16.msra.mxu0 0
        %902 = vmatprep.subr.bf16.mxu0 0
        %903 = vmatpush1.bf16.msra.mxu0 0
        %904 = vmatprep.subr.bf16.mxu0 0
        %905 = vmatpush1.bf16.msra.mxu0 0
        %906 = vmatprep.subr.bf16.mxu0 0
        %907 = vmatpush1.bf16.msra.mxu0 0
        %908 = vmatprep.subr.bf16.mxu0 0
        %909 = vmatpush1.bf16.msra.mxu0 0
        %910 = vmatprep.mubr.bf16.mxu0 0
        %911 = vmatmul.mubr.bf16.gmra.mrb[0].mxu0 %v399
        %v912 = vpop.f32.mrb[0].mxu0
        %v913 = vadd.f32 0.0, %v912
        %v914 = vpop.f32.mrb[0].mxu0
        %v915 = vpop.f32.mrb[0].mxu0
        %v916 = vpop.f32.mrb[0].mxu0
        %917 = vdwg.mxu0
        %v918 = vpack.c.bf16 %v913, %v913
        %919 = vst.msk [vmem:[%s340] sm:$0xf] %vm442, %v918
        %s920 = scalar_lea.vmem %s5, 16
        %v921 = vld [vmem:[%s920] sm:$0xf]
        %v922 = vld [vmem:[%s920 + $0x4] sm:$0xf]
        %v923 = vld [vmem:[%s920 + $0x8] sm:$0xf]
        %v924 = vld [vmem:[%s920 + $0xc] sm:$0xf]
        %v929 = vunpack.c.l.b16 %v921
        %v930 = vunpack.c.l.b16 %v922
        %v931 = vunpack.c.l.b16 %v923
        %v932 = vunpack.c.l.b16 %v924
        %v933 = vpack.c.b16 %v930, %v929
        %v934 = vpack.c.b16 %v932, %v931
        %937 = vmatprep.subr.bf16.mxu0 0
        %938 = vmatpush1.bf16.msra.mxu0 %v933
        %939 = vmatprep.subr.bf16.mxu0 0
        %940 = vmatpush1.bf16.msra.mxu0 %v934
        %941 = vmatprep.subr.bf16.mxu0 0
        %942 = vmatpush1.bf16.msra.mxu0 0
        %943 = vmatprep.subr.bf16.mxu0 0
        %944 = vmatpush1.bf16.msra.mxu0 0
        %945 = vmatprep.subr.bf16.mxu0 0
        %946 = vmatpush1.bf16.msra.mxu0 0
        %947 = vmatprep.subr.bf16.mxu0 0
        %948 = vmatpush1.bf16.msra.mxu0 0
        %949 = vmatprep.subr.bf16.mxu0 0
        %950 = vmatpush1.bf16.msra.mxu0 0
        %951 = vmatprep.subr.bf16.mxu0 0
        %952 = vmatpush1.bf16.msra.mxu0 0
        %953 = vmatprep.subr.bf16.mxu0 0
        %954 = vmatpush1.bf16.msra.mxu0 0
        %955 = vmatprep.subr.bf16.mxu0 0
        %956 = vmatpush1.bf16.msra.mxu0 0
        %957 = vmatprep.subr.bf16.mxu0 0
        %958 = vmatpush1.bf16.msra.mxu0 0
        %959 = vmatprep.subr.bf16.mxu0 0
        %960 = vmatpush1.bf16.msra.mxu0 0
        %961 = vmatprep.subr.bf16.mxu0 0
        %962 = vmatpush1.bf16.msra.mxu0 0
        %963 = vmatprep.subr.bf16.mxu0 0
        %964 = vmatpush1.bf16.msra.mxu0 0
        %965 = vmatprep.subr.bf16.mxu0 0
        %966 = vmatpush1.bf16.msra.mxu0 0
        %967 = vmatprep.subr.bf16.mxu0 0
        %968 = vmatpush1.bf16.msra.mxu0 0
        %969 = vmatprep.mubr.bf16.mxu0 0
        %970 = vmatmul.mubr.bf16.gmra.mrb[0].mxu0 %v399
        %v971 = vpop.f32.mrb[0].mxu0
        %v972 = vadd.f32 0.0, %v971
        %v973 = vpop.f32.mrb[0].mxu0
        %v974 = vpop.f32.mrb[0].mxu0
        %v975 = vpop.f32.mrb[0].mxu0
        %976 = vdwg.mxu0
        %v977 = vpack.c.bf16 %v972, %v972
        %s978 = scalar_lea.vmem %s340, 4 [#allocation6]
        %979 = vst.msk [vmem:[%s978] sm:$0xf] %vm442, %v977
        %s980 = scalar_lea.vmem %s5, 32
        %v981 = vld [vmem:[%s980] sm:$0xf]
        %v982 = vld [vmem:[%s980 + $0x4] sm:$0xf]
        %v983 = vld [vmem:[%s980 + $0x8] sm:$0xf]
        %v984 = vld [vmem:[%s980 + $0xc] sm:$0xf]
        %v989 = vunpack.c.l.b16 %v981
        %v990 = vunpack.c.l.b16 %v982
        %v991 = vunpack.c.l.b16 %v983
        %v992 = vunpack.c.l.b16 %v984
        %v993 = vpack.c.b16 %v990, %v989
        %v994 = vpack.c.b16 %v992, %v991
        %997 = vmatprep.subr.bf16.mxu0 0
        %998 = vmatpush1.bf16.msra.mxu0 %v993
        %999 = vmatprep.subr.bf16.mxu0 0
        %1000 = vmatpush1.bf16.msra.mxu0 %v994
        %1001 = vmatprep.subr.bf16.mxu0 0
        %1002 = vmatpush1.bf16.msra.mxu0 0
        %1003 = vmatprep.subr.bf16.mxu0 0
        %1004 = vmatpush1.bf16.msra.mxu0 0
        %1005 = vmatprep.subr.bf16.mxu0 0
        %1006 = vmatpush1.bf16.msra.mxu0 0
        %1007 = vmatprep.subr.bf16.mxu0 0
        %1008 = vmatpush1.bf16.msra.mxu0 0
        %1009 = vmatprep.subr.bf16.mxu0 0
        %1010 = vmatpush1.bf16.msra.mxu0 0
        %1011 = vmatprep.subr.bf16.mxu0 0
        %1012 = vmatpush1.bf16.msra.mxu0 0
        %1013 = vmatprep.subr.bf16.mxu0 0
        %1014 = vmatpush1.bf16.msra.mxu0 0
        %1015 = vmatprep.subr.bf16.mxu0 0
        %1016 = vmatpush1.bf16.msra.mxu0 0
        %1017 = vmatprep.subr.bf16.mxu0 0
        %1018 = vmatpush1.bf16.msra.mxu0 0
        %1019 = vmatprep.subr.bf16.mxu0 0
        %1020 = vmatpush1.bf16.msra.mxu0 0
        %1021 = vmatprep.subr.bf16.mxu0 0
        %1022 = vmatpush1.bf16.msra.mxu0 0
        %1023 = vmatprep.subr.bf16.mxu0 0
        %1024 = vmatpush1.bf16.msra.mxu0 0
        %1025 = vmatprep.subr.bf16.mxu0 0
        %1026 = vmatpush1.bf16.msra.mxu0 0
        %1027 = vmatprep.subr.bf16.mxu0 0
        %1028 = vmatpush1.bf16.msra.mxu0 0
        %1029 = vmatprep.mubr.bf16.mxu0 0
        %1030 = vmatmul.mubr.bf16.gmra.mrb[0].mxu0 %v399
        %v1031 = vpop.f32.mrb[0].mxu0
        %v1032 = vadd.f32 0.0, %v1031
        %v1033 = vpop.f32.mrb[0].mxu0
        %v1034 = vpop.f32.mrb[0].mxu0
        %v1035 = vpop.f32.mrb[0].mxu0
        %1036 = vdwg.mxu0
        %v1037 = vpack.c.bf16 %v1032, %v1032
        %s1038 = scalar_lea.vmem %s340, 8 [#allocation6]
        %1039 = vst.msk [vmem:[%s1038] sm:$0xf] %vm442, %v1037
        %s1040 = scalar_lea.vmem %s5, 48
        %v1041 = vld [vmem:[%s1040] sm:$0xf]
        %v1042 = vld [vmem:[%s1040 + $0x4] sm:$0xf]
        %v1043 = vld [vmem:[%s1040 + $0x8] sm:$0xf]
        %v1044 = vld [vmem:[%s1040 + $0xc] sm:$0xf]
        %v1049 = vunpack.c.l.b16 %v1041
        %v1050 = vunpack.c.l.b16 %v1042
        %v1051 = vunpack.c.l.b16 %v1043
        %v1052 = vunpack.c.l.b16 %v1044
        %v1053 = vpack.c.b16 %v1050, %v1049
        %v1054 = vpack.c.b16 %v1052, %v1051
        %1057 = vmatprep.subr.bf16.mxu0 0
        %1058 = vmatpush1.bf16.msra.mxu0 %v1053
        %1059 = vmatprep.subr.bf16.mxu0 0
        %1060 = vmatpush1.bf16.msra.mxu0 %v1054
        %1061 = vmatprep.subr.bf16.mxu0 0
        %1062 = vmatpush1.bf16.msra.mxu0 0
        %1063 = vmatprep.subr.bf16.mxu0 0
        %1064 = vmatpush1.bf16.msra.mxu0 0
        %1065 = vmatprep.subr.bf16.mxu0 0
        %1066 = vmatpush1.bf16.msra.mxu0 0
        %1067 = vmatprep.subr.bf16.mxu0 0
        %1068 = vmatpush1.bf16.msra.mxu0 0
        %1069 = vmatprep.subr.bf16.mxu0 0
        %1070 = vmatpush1.bf16.msra.mxu0 0
        %1071 = vmatprep.subr.bf16.mxu0 0
        %1072 = vmatpush1.bf16.msra.mxu0 0
        %1073 = vmatprep.subr.bf16.mxu0 0
        %1074 = vmatpush1.bf16.msra.mxu0 0
        %1075 = vmatprep.subr.bf16.mxu0 0
        %1076 = vmatpush1.bf16.msra.mxu0 0
        %1077 = vmatprep.subr.bf16.mxu0 0
        %1078 = vmatpush1.bf16.msra.mxu0 0
        %1079 = vmatprep.subr.bf16.mxu0 0
        %1080 = vmatpush1.bf16.msra.mxu0 0
        %1081 = vmatprep.subr.bf16.mxu0 0
        %1082 = vmatpush1.bf16.msra.mxu0 0
        %1083 = vmatprep.subr.bf16.mxu0 0
        %1084 = vmatpush1.bf16.msra.mxu0 0
        %1085 = vmatprep.subr.bf16.mxu0 0
        %1086 = vmatpush1.bf16.msra.mxu0 0
        %1087 = vmatprep.subr.bf16.mxu0 0
        %1088 = vmatpush1.bf16.msra.mxu0 0
        %1089 = vmatprep.mubr.bf16.mxu0 0
        %1090 = vmatmul.mubr.bf16.gmra.mrb[0].mxu0 %v399
        %v1091 = vpop.f32.mrb[0].mxu0
        %v1092 = vadd.f32 0.0, %v1091
        %v1093 = vpop.f32.mrb[0].mxu0
        %v1094 = vpop.f32.mrb[0].mxu0
        %v1095 = vpop.f32.mrb[0].mxu0
        %1096 = vdwg.mxu0
        %v1097 = vpack.c.bf16 %v1092, %v1092
        %s1098 = scalar_lea.vmem %s340, 12 [#allocation6]
        %1099 = vst.msk [vmem:[%s1098] sm:$0xf] %vm442, %v1097
        %s1100 = sand.u32 %s181, 1
        %s1101 = scalar_lea.sflag [#allocation3], %s1100
        %s1102 = sand.u32 %s181, 1
        %s1103 = smul.addr %s1102, 16
        %s1104 = scalar_lea.vmem [#allocation2], %s1103
        %s1105 = sand.u32 %s26, 1
        %s1106 = scalar_lea.sflag [#allocation5], %s1105
        %s1107 = sand.u32 %s209, 1
        %s1108 = smul.addr %s1107, 16
        %s1109 = scalar_lea.vmem [#allocation4], %s1108
        %s1110 = sand.u32 %s26, 1
        %s1111 = scalar_lea.sflag [#allocation5], %s1110
        %s1112 = sand.u32 %s237, 1
        %s1113 = smul.addr %s1112, 16
        %s1114 = scalar_lea.vmem [#allocation6], %s1113
        // Predicated region
        $region45: #{tpu_custom_call.1} parent=43 // pred_check
          %p1115 = pneg %p191
        $region46: #{tpu_custom_call.1} parent=43 // pred_check_branch
          %1117 = sbr.rel (%p1115) target = $region48
        $region47: #{tpu_custom_call.1} parent=43 // pred_region
          %s1119 = ssub.s32 256, 256
          %1120 = vsyncadd %s1101, %s1119
          %s1121 = smul.addr %s30, 4
          %s1122 = sadd.s32 %s31, %s1121
          %s1123 = smul.addr %s1122, 64
          %s1124 = scalar_lea.hbm %s6, %s1123
          %s1125 = sshll.u32 %s1104, 4
          %s1126 = int_to_ptr.vmem [resolvable:$true] %s1125
          %1131 = dma.vmem_to_hbm [thread:$0]  %s1126, 256, %s1124, %s1101, 64, 64, 4
        $region48: #{tpu_custom_call.1} parent=43 // pred_fallthru
          _
        // Predicated region
        $region49: #{tpu_custom_call.1} parent=43 // pred_check
          %p1132 = pneg %p219
        $region50: #{tpu_custom_call.1} parent=43 // pred_check_branch
          %1134 = sbr.rel (%p1132) target = $region52
        $region51: #{tpu_custom_call.1} parent=43 // pred_region
          %s1136 = ssub.s32 256, 256
          %1137 = vsyncadd %s1106, %s1136
          %s1138 = smul.addr %s30, 4
          %s1139 = sadd.s32 %s31, %s1138
          %s1140 = smul.addr %s1139, 64
          %s1141 = scalar_lea.hbm %s7, %s1140
          %s1142 = sshll.u32 %s1109, 4
          %s1143 = int_to_ptr.vmem [resolvable:$true] %s1142
          %1148 = dma.vmem_to_hbm [thread:$0]  %s1143, 256, %s1141, %s1106, 64, 64, 4
        $region52: #{tpu_custom_call.1} parent=43 // pred_fallthru
          _
        // Predicated region
        $region53: #{tpu_custom_call.1} parent=43 // pred_check
          %p1149 = pneg %p247
        $region54: #{tpu_custom_call.1} parent=43 // pred_check_branch
          %1151 = sbr.rel (%p1149) target = $region56
        $region55: #{tpu_custom_call.1} parent=43 // pred_region
          %s1153 = ssub.s32 256, 256
          %1154 = vsyncadd %s1111, %s1153
          %s1155 = smul.addr %s30, 4
          %s1156 = sadd.s32 %s31, %s1155
          %s1157 = smul.addr %s1156, 64
          %s1158 = scalar_lea.hbm %s8, %s1157
          %s1159 = sshll.u32 %s1114, 4
          %s1160 = int_to_ptr.vmem [resolvable:$true] %s1159
          %1165 = dma.vmem_to_hbm [thread:$0]  %s1160, 256, %s1158, %s1111, 64, 64, 4
        $region56: #{tpu_custom_call.1} parent=43 // pred_fallthru
          _
      $region44: #{tpu_custom_call.1} parent=5 // pred_fallthru
        _
      %p1166 = scmp.le.s32.totalorder 2, %s21
      // Predicated region
      $region57: #{tpu_custom_call.1} parent=5 // pred_check
        %p1167 = pneg %p1166
      $region58: #{tpu_custom_call.1} parent=5 // pred_check_branch
        %1169 = sbr.rel (%p1167) target = $region60
      $region59: #{tpu_custom_call.1} parent=5 // pred_region
        %s1170 = ssub.s32 %s21, 2
        // Predicated region
        $region61: #{tpu_custom_call.1} parent=59 // pred_check
          %p1171 = pneg %p197
        $region62: #{tpu_custom_call.1} parent=59 // pred_check_branch
          %1173 = sbr.rel (%p1171) target = $region64
        $region63: #{tpu_custom_call.1} parent=59 // pred_region
          %s1174 = sand.u32 %s182, 1
          %s1175 = scalar_lea.sflag [#allocation3], %s1174
          %s1176 = sand.u32 %s182, 1
          %s1177 = smul.addr %s1176, 16
          %s1178 = scalar_lea.vmem [#allocation2], %s1177
          %1179 = dma.done %s1175, 256
        $region64: #{tpu_custom_call.1} parent=59 // pred_fallthru
          _
        // Predicated region
        $region65: #{tpu_custom_call.1} parent=59 // pred_check
          %p1180 = pneg %p225
        $region66: #{tpu_custom_call.1} parent=59 // pred_check_branch
          %1182 = sbr.rel (%p1180) target = $region68
        $region67: #{tpu_custom_call.1} parent=59 // pred_region
          %s1183 = sand.u32 %s27, 1
          %s1184 = scalar_lea.sflag [#allocation5], %s1183
          %s1185 = sand.u32 %s210, 1
          %s1186 = smul.addr %s1185, 16
          %s1187 = scalar_lea.vmem [#allocation4], %s1186
          %1188 = dma.done %s1184, 256
        $region68: #{tpu_custom_call.1} parent=59 // pred_fallthru
          _
        // Predicated region
        $region69: #{tpu_custom_call.1} parent=59 // pred_check
          %p1189 = pneg %p253
        $region70: #{tpu_custom_call.1} parent=59 // pred_check_branch
          %1191 = sbr.rel (%p1189) target = $region72
        $region71: #{tpu_custom_call.1} parent=59 // pred_region
          %s1192 = sand.u32 %s27, 1
          %s1193 = scalar_lea.sflag [#allocation5], %s1192
          %s1194 = sand.u32 %s238, 1
          %s1195 = smul.addr %s1194, 16
          %s1196 = scalar_lea.vmem [#allocation6], %s1195
          %1197 = dma.done %s1193, 256
        $region72: #{tpu_custom_call.1} parent=59 // pred_fallthru
          _
      $region60: #{tpu_custom_call.1} parent=5 // pred_fallthru
        _
    $region6: #{tpu_custom_call.1} parent=1 // loop_footer
      %s25 = sadd.s32 1, %s21
    $region7: #{tpu_custom_call.1} parent=1 // loop_footer_branch
      %20 = sbr.rel target = $region3
    $region8: #{tpu_custom_call.1} parent=1 // loop_exit
      _
    %1198 = vsyncpa [#allocation3], 1
    %s1199 = scalar_lea.sflag [#allocation3], 1
    %1200 = vsyncpa %s1199, 1
    %1201 = vsyncpa [#allocation5], 1
    %s1202 = scalar_lea.sflag [#allocation5], 1
    %1203 = vsyncpa %s1202, 1

</llo_original>
